<compile_context>
chip_gen: v5e
topology: v5e:2x2
jax: 0.10.0
libtpu: 0.0.40
codegen_flags: <defaults>
</compile_context>

<pallas_src>
import numpy as np
import jax
import jax.numpy as jnp
from jax.experimental import pallas as pl
from jax.experimental.pallas import tpu as pltpu

# ---------------- configuration (small shapes consistent with the module) ---
B = 2
H = W = 8                   # input_resolution
C = 32                      # embed_dim
NUM_HEADS = 4
WS = 4                      # window_size
SHIFT = 2                   # shift_size (exercises the shifted-window path)
MLP_RATIO = 4
HD = C // NUM_HEADS         # head dim
N = WS * WS                 # tokens per window
NW = (H // WS) * (W // WS)  # windows per image
WL = NW * N                 # tokens per image (= H*W) in windowed order
HID = MLP_RATIO * C         # MLP hidden width (128, lane-dense)
SCALE = HD ** -0.5
LN_EPS = 1e-5
NEG = -1e9                  # cross-window mask value (exp underflows to 0)
SC = NUM_HEADS * WL         # packed score width (4*64 = 256 lanes)


# ---------------- small math helpers (usable inside kernels) ----------------
def _ln(x, g, b):
    mu = jnp.mean(x, axis=-1, keepdims=True)
    xc = x - mu
    var = jnp.mean(xc * xc, axis=-1, keepdims=True)
    return xc * jax.lax.rsqrt(var + LN_EPS) * g + b


def _gelu_tanh(x):
    # tanh-form GELU: runs on the EUP slot; |err| vs exact GELU < 3e-3.
    c = 0.7978845608028654  # sqrt(2/pi)
    return 0.5 * x * (1.0 + jnp.tanh(c * (x + 0.044715 * x * x * x)))


# ---------------- fused Pallas kernel (single grid step) --------------------
def swin_block_kernel(x_ref, ln1g_ref, ln1b_ref, wq_ref, bq_ref,
                      wkT_ref, bkT_ref, wv_ref, bv_ref,
                      wproj_ref, bproj_ref, bias_ref, kmask_ref, vmask_ref,
                      ln2g_ref, ln2b_ref, w1_ref, b1_ref, w2_ref, b2_ref,
                      o_ref):
    xfull = x_ref[...]                         # (B*WL, C) f32, permuted order
    kmask = kmask_ref[...]                     # (C, nH*WL) 0/1 head selector
    vmask = vmask_ref[...]                     # (nH*WL, C) 0/1 head selector
    vmask16 = vmask.astype(jnp.bfloat16)       # also the softmax-denominator summer

    halves = []
    for b in range(B):                         # static unroll over the 2 images
        xb = xfull[b * WL:(b + 1) * WL, :]                        # (WL, C)
        xn = _ln(xb, ln1g_ref[...], ln1b_ref[...]).astype(jnp.bfloat16)

        # Q (scale folded into the bf16 weights on the host), K^T, V.
        q = (jnp.dot(xn, wq_ref[...], preferred_element_type=jnp.float32)
             + bq_ref[...])                                       # (WL, C) f32
        ktb = jax.lax.dot_general(                                # (C, WL) = K^T
            wkT_ref[...], xn, (((1,), (1,)), ((), ())),
            preferred_element_type=jnp.float32) + bkT_ref[...]
        v = (jnp.dot(xn, wv_ref[...], preferred_element_type=jnp.float32)
             + bv_ref[...])                                       # (WL, C) f32

        # Block-diagonal (per-head) K^T and V: kmask/vmask zero the channels
        # that belong to other heads, so one big matmul yields per-head results.
        kt_bd = (jnp.concatenate([ktb] * NUM_HEADS, axis=1)
                 * kmask).astype(jnp.bfloat16)                    # (C, nH*WL)
        v_bd = (jnp.concatenate([v] * NUM_HEADS, axis=0)
                * vmask).astype(jnp.bfloat16)                     # (nH*WL, C)

        # All heads' scores lane-packed into (WL, nH*WL); cross-window entries
        # get -1e9 from bias_ref and exp() to exactly 0.
        s = jnp.dot(q.astype(jnp.bfloat16), kt_bd,
                    preferred_element_type=jnp.float32)
        s = s + bias_ref[...]            # rel-pos bias + shift mask + (-1e9)
        s = s - jnp.max(s, axis=-1, keepdims=True)   # per-row const -> softmax-safe
        e = jnp.exp(s).astype(jnp.bfloat16)

        num = jnp.dot(e, v_bd, preferred_element_type=jnp.float32)    # (WL, C)
        den = jnp.dot(e, vmask16, preferred_element_type=jnp.float32) # (WL, C)
        ctx = num * pl.reciprocal(den, approx=True)  # normalized multi-head PV
        halves.append(jnp.dot(ctx.astype(jnp.bfloat16), wproj_ref[...],
                              preferred_element_type=jnp.float32))

    # ---- residual-1 (proj bias added once for both images) ----
    x1 = xfull + jnp.concatenate(halves, axis=0) + bproj_ref[...]

    # ---- norm_two + MLP + residual-2, batched over both images (M = 128) ----
    y = _ln(x1, ln2g_ref[...], ln2b_ref[...]).astype(jnp.bfloat16)
    hid = jnp.dot(y, w1_ref[...], preferred_element_type=jnp.float32) + b1_ref[...]
    hid = _gelu_tanh(hid).astype(jnp.bfloat16)        # (B*WL, HID) lane-dense
    out = x1 + (jnp.dot(hid, w2_ref[...], preferred_element_type=jnp.float32)
                + b2_ref[...])
    o_ref[...] = out.astype(o_ref.dtype)


# ---------------- pallas_call wrapper ----------------------------------------
def _cost_estimate():
    flops_attn = B * (3 * 2 * WL * C * C          # q, k^T, v projections
                      + 2 * WL * C * SC           # packed scores
                      + 2 * 2 * WL * SC * C       # PV + denominator
                      + 2 * WL * C * C)           # output projection
    flops_mlp = 2 * (B * WL) * C * HID * 2
    trans = B * WL * SC + (B * WL) * HID + 2 * B * WL * C
    bytes_acc = (2 * B * WL * C * 4                               # x in/out
                 + (4 * C * C + C * HID + HID * C) * 2            # bf16 weights
                 + (WL * SC + C * SC + SC * C) * 4                # bias + masks
                 + (8 * C + HID) * 4)                             # ln/bias vectors
    return pl.CostEstimate(flops=flops_attn + flops_mlp,
                           transcendentals=trans,
                           bytes_accessed=bytes_acc)


def _full_spec(shape):
    n = len(shape)
    return pl.BlockSpec(shape, lambda i, _n=n: (0,) * _n)


def swin_block_pallas(xw, kp):
    """xw: (B*WL, C) f32 tokens already in shifted+windowed order."""
    operands = [
        xw,
        kp["ln1_g"], kp["ln1_b"],
        kp["wq"], kp["bq"], kp["wkT"], kp["bkT"], kp["wv"], kp["bv"],
        kp["wproj"], kp["bproj"],
        kp["bias_packed"], kp["kmask"], kp["vmask"],
        kp["ln2_g"], kp["ln2_b"],
        kp["fc1_w"], kp["fc1_b"], kp["fc2_w"], kp["fc2_b"],
    ]
    in_specs = [_full_spec(tuple(op.shape)) for op in operands]
    return pl.pallas_call(
        swin_block_kernel,
        out_shape=jax.ShapeDtypeStruct((B * WL, C), xw.dtype),
        grid_spec=pltpu.PrefetchScalarGridSpec(
            num_scalar_prefetch=0,
            grid=(1,),
            in_specs=in_specs,
            out_specs=_full_spec((B * WL, C)),
        ),
        compiler_params=pltpu.CompilerParams(
            dimension_semantics=("arbitrary",),
            vmem_limit_bytes=32 * 1024 * 1024),
        cost_estimate=_cost_estimate(),
    )(*operands)


# ---------------- plain-JAX glue (permutation only) ---------------------------
def window_partition(x, ws):
    Bq, Hq, Wq, Cq = x.shape
    x = x.reshape(Bq, Hq // ws, ws, Wq // ws, ws, Cq)
    x = x.transpose(0, 1, 3, 2, 4, 5)
    return x.reshape(-1, ws, ws, Cq)


def window_reverse(wins, ws, Hq, Wq):
    Bq = wins.shape[0] // ((Hq // ws) * (Wq // ws))
    x = wins.reshape(Bq, Hq // ws, Wq // ws, ws, ws, -1)
    x = x.transpose(0, 1, 3, 2, 4, 5)
    return x.reshape(Bq, Hq, Wq, -1)


def relative_position_index(ws):
    coords = np.stack(np.meshgrid(np.arange(ws), np.arange(ws), indexing="ij"))
    coords = coords.reshape(2, -1)                                # (2, N)
    rel = coords[:, :, None] - coords[:, None, :]                 # (2, N, N)
    rel = rel.transpose(1, 2, 0).astype(np.int64)
    rel[:, :, 0] += ws - 1
    rel[:, :, 1] += ws - 1
    rel[:, :, 0] *= 2 * ws - 1
    return rel.sum(-1)                                            # (N, N)


def attention_mask():
    if SHIFT == 0:
        return np.zeros((NW, N, N), np.float32)
    img_mask = np.zeros((1, H, W, 1), np.float32)
    slices = (slice(0, -WS), slice(-WS, -SHIFT), slice(-SHIFT, None))
    cnt = 0
    for hs in slices:
        for wsl in slices:
            img_mask[:, hs, wsl, :] = cnt
            cnt += 1
    mw = img_mask.reshape(1, H // WS, WS, W // WS, WS, 1)
    mw = mw.transpose(0, 1, 3, 2, 4, 5).reshape(-1, N)
    am = mw[:, None, :] - mw[:, :, None]
    return np.where(am != 0, -100.0, 0.0).astype(np.float32)


def build_params(key):
    """f32 master parameters (used verbatim by the pure-JAX reference)."""
    ks = jax.random.split(key, 9)
    p = {
        "ln1_g": jnp.ones((1, C), jnp.float32),
        "ln1_b": jnp.zeros((1, C), jnp.float32),
        "ln2_g": jnp.ones((1, C), jnp.float32),
        "ln2_b": jnp.zeros((1, C), jnp.float32),
        "wqkv": 0.02 * jax.random.normal(ks[0], (C, 3 * C), jnp.float32),
        "bqkv": 0.02 * jax.random.normal(ks[1], (1, 3 * C), jnp.float32),
        "wproj": 0.02 * jax.random.normal(ks[2], (C, C), jnp.float32),
        "bproj": 0.02 * jax.random.normal(ks[3], (1, C), jnp.float32),
        "fc1_w": 0.02 * jax.random.normal(ks[4], (C, HID), jnp.float32),
        "fc1_b": 0.02 * jax.random.normal(ks[5], (1, HID), jnp.float32),
        "fc2_w": 0.02 * jax.random.normal(ks[6], (HID, C), jnp.float32),
        "fc2_b": 0.02 * jax.random.normal(ks[7], (1, C), jnp.float32),
        "rel_table": 0.02 * jax.random.normal(
            ks[8], ((2 * WS - 1) * (2 * WS - 1), NUM_HEADS), jnp.float32),
    }
    rel_idx = relative_position_index(WS)
    rel_bias = p["rel_table"][rel_idx.reshape(-1)].reshape(N, N, NUM_HEADS)
    rel_bias = jnp.transpose(rel_bias, (2, 0, 1))                 # (nH, N, N)
    mask = jnp.asarray(attention_mask())                          # (NW, N, N)
    p["bias_win"] = rel_bias[None, :, :, :] + mask[:, None, :, :]  # (NW, nH, N, N)
    return p


def build_kernel_operands(p):
    """One-time host-side transform: bf16 weights, folded scale, packed bias/masks."""
    bf = jnp.bfloat16
    wq, wk, wv = p["wqkv"][:, :C], p["wqkv"][:, C:2 * C], p["wqkv"][:, 2 * C:]
    bq, bk, bv = p["bqkv"][:, :C], p["bqkv"][:, C:2 * C], p["bqkv"][:, 2 * C:]

    # block-diagonal (nH, WL, WL) per-head bias -> lane-packed (WL, nH*WL).
    blk = jnp.full((NUM_HEADS, WL, WL), NEG, jnp.float32)
    for w in range(NW):
        blk = blk.at[:, w * N:(w + 1) * N, w * N:(w + 1) * N].set(p["bias_win"][w])
    bias_packed = jnp.concatenate([blk[h] for h in range(NUM_HEADS)], axis=1)

    # 0/1 head-selection masks for block-diagonal K^T / V / softmax denominator.
    kmask = np.zeros((C, SC), np.float32)
    for h in range(NUM_HEADS):
        kmask[h * HD:(h + 1) * HD, h * WL:(h + 1) * WL] = 1.0
    vmask = kmask.T.copy()                                         # (nH*WL, C)

    return {
        "ln1_g": p["ln1_g"], "ln1_b": p["ln1_b"],
        "ln2_g": p["ln2_g"], "ln2_b": p["ln2_b"],
        "wq": (wq * SCALE).astype(bf), "bq": bq * SCALE,           # scale folded
        "wkT": jnp.transpose(wk).astype(bf), "bkT": jnp.transpose(bk),  # (C,C)/(C,1)
        "wv": wv.astype(bf), "bv": bv,
        "wproj": p["wproj"].astype(bf), "bproj": p["bproj"],
        "fc1_w": p["fc1_w"].astype(bf), "fc1_b": p["fc1_b"],
        "fc2_w": p["fc2_w"].astype(bf), "fc2_b": p["fc2_b"],
        "bias_packed": bias_packed,
        "kmask": jnp.asarray(kmask), "vmask": jnp.asarray(vmask),
    }


def swin_block_forward(x, kp):
    Bq, L, Cq = x.shape
    # wrapper-side forward permutation: cyclic shift + window partition.
    # (LayerNorm / residual / MLP are per-token, so they commute with it and
    #  are done inside the fused kernel in permuted order.)
    x4 = x.reshape(Bq, H, W, Cq)
    xs = jnp.roll(x4, shift=(-SHIFT, -SHIFT), axis=(1, 2)) if SHIFT > 0 else x4
    xw = window_partition(xs, WS).reshape(Bq * WL, Cq)
    out_p = swin_block_pallas(xw, kp)                  # (B*WL, C)
    # inverse permutation: window reverse + reverse cyclic shift.
    aw = out_p.reshape(-1, WS, WS, Cq)
    xr = window_reverse(aw, WS, H, W)
    xo = jnp.roll(xr, shift=(SHIFT, SHIFT), axis=(1, 2)) if SHIFT > 0 else xr
    return xo.reshape(Bq, L, Cq)


# ---------------- pure-JAX reference (for sanity check only) ----------------
def reference_forward(x, p):
    Bq, L, Cq = x.shape
    shortcut = x
    xn = _ln(x, p["ln1_g"].reshape(-1), p["ln1_b"].reshape(-1))
    xn = xn.reshape(Bq, H, W, Cq)
    xs = jnp.roll(xn, (-SHIFT, -SHIFT), axis=(1, 2)) if SHIFT > 0 else xn
    xw = window_partition(xs, WS).reshape(-1, N, Cq)
    qkv = jnp.einsum("wnc,cd->wnd", xw, p["wqkv"],
                     precision="highest") + p["bqkv"].reshape(1, 1, -1)
    q, k, v = jnp.split(qkv, 3, axis=-1)

    def sh(t):
        return t.reshape(-1, N, NUM_HEADS, HD).transpose(0, 2, 1, 3)

    q, k, v = sh(q) * SCALE, sh(k), sh(v)
    bias_all = jnp.tile(p["bias_win"], (Bq, 1, 1, 1))             # (B*NW, nH, N, N)
    s = jnp.einsum("whnd,whmd->whnm", q, k, precision="highest") + bias_all
    a = jax.nn.softmax(s, axis=-1)
    o = jnp.einsum("whnm,whmd->whnd", a, v, precision="highest")
    o = o.transpose(0, 2, 1, 3).reshape(-1, N, Cq)
    o = jnp.einsum("wnc,cd->wnd", o, p["wproj"],
                   precision="highest") + p["bproj"].reshape(1, 1, -1)
    o = o.reshape(-1, WS, WS, Cq)
    xs = window_reverse(o, WS, H, W)
    xi = jnp.roll(xs, (SHIFT, SHIFT), axis=(1, 2)) if SHIFT > 0 else xs
    x1 = shortcut + xi.reshape(Bq, L, Cq)
    y = _ln(x1, p["ln2_g"].reshape(-1), p["ln2_b"].reshape(-1))
    hdn = jnp.einsum("blc,cd->bld", y, p["fc1_w"],
                     precision="highest") + p["fc1_b"].reshape(1, 1, -1)
    hdn = jax.nn.gelu(hdn, approximate=False)
    out = x1 + jnp.einsum("bld,dc->blc", hdn, p["fc2_w"],
                          precision="highest") + p["fc2_b"].reshape(1, 1, -1)
    return out


# ---------------- main --------------------------------------------------------
if __name__ == "__main__":
    key = jax.random.PRNGKey(0)
    kx, kparam = jax.random.split(key)
    params = build_params(kparam)
    kernel_ops = build_kernel_operands(params)
    x = jax.random.normal(kx, (B, H * W, C), jnp.float32)

    out = jax.block_until_ready(swin_block_forward(x, kernel_ops))
    ref = jax.block_until_ready(reference_forward(x, params))
    np.testing.assert_allclose(np.asarray(out), np.asarray(ref),
                               rtol=1e-2, atol=1e-2)
    print("KERNEL_OK")
</pallas_src>

<mosaic_0001>
module attributes {stable_mosaic.version = 11 : i64} {
  func.func @swin_block_kernel(%arg0: i32, %arg1: memref<128x32xf32, #tpu.memory_space<vmem>>, %arg2: memref<1x32xf32, #tpu.memory_space<vmem>>, %arg3: memref<1x32xf32, #tpu.memory_space<vmem>>, %arg4: memref<32x32xbf16, #tpu.memory_space<vmem>>, %arg5: memref<1x32xf32, #tpu.memory_space<vmem>>, %arg6: memref<32x32xbf16, #tpu.memory_space<vmem>>, %arg7: memref<32x1xf32, #tpu.memory_space<vmem>>, %arg8: memref<32x32xbf16, #tpu.memory_space<vmem>>, %arg9: memref<1x32xf32, #tpu.memory_space<vmem>>, %arg10: memref<32x32xbf16, #tpu.memory_space<vmem>>, %arg11: memref<1x32xf32, #tpu.memory_space<vmem>>, %arg12: memref<64x256xf32, #tpu.memory_space<vmem>>, %arg13: memref<32x256xf32, #tpu.memory_space<vmem>>, %arg14: memref<256x32xf32, #tpu.memory_space<vmem>>, %arg15: memref<1x32xf32, #tpu.memory_space<vmem>>, %arg16: memref<1x32xf32, #tpu.memory_space<vmem>>, %arg17: memref<32x128xbf16, #tpu.memory_space<vmem>>, %arg18: memref<1x128xf32, #tpu.memory_space<vmem>>, %arg19: memref<128x32xbf16, #tpu.memory_space<vmem>>, %arg20: memref<1x32xf32, #tpu.memory_space<vmem>>, %arg21: memref<128x32xf32, #tpu.memory_space<vmem>>) attributes {dimension_semantics = [#tpu.dimension_semantics<arbitrary>], iteration_bounds = array<i64: 1>, scalar_prefetch = 0 : i64, scratch_operands = 0 : i64, tpu.core_type = #tpu.core_type<tc>, window_params = [{pipeline_mode = #tpu.pipeline_mode<synchronous>, transform_indices = @transform_0, window_bounds = array<i64: 128, 32>}, {pipeline_mode = #tpu.pipeline_mode<synchronous>, transform_indices = @transform_1, window_bounds = array<i64: 1, 32>}, {pipeline_mode = #tpu.pipeline_mode<synchronous>, transform_indices = @transform_2, window_bounds = array<i64: 1, 32>}, {pipeline_mode = #tpu.pipeline_mode<synchronous>, transform_indices = @transform_3, window_bounds = array<i64: 32, 32>}, {pipeline_mode = #tpu.pipeline_mode<synchronous>, transform_indices = @transform_4, window_bounds = array<i64: 1, 32>}, {pipeline_mode = #tpu.pipeline_mode<synchronous>, transform_indices = @transform_5, window_bounds = array<i64: 32, 32>}, {pipeline_mode = #tpu.pipeline_mode<synchronous>, transform_indices = @transform_6, window_bounds = array<i64: 32, 1>}, {pipeline_mode = #tpu.pipeline_mode<synchronous>, transform_indices = @transform_7, window_bounds = array<i64: 32, 32>}, {pipeline_mode = #tpu.pipeline_mode<synchronous>, transform_indices = @transform_8, window_bounds = array<i64: 1, 32>}, {pipeline_mode = #tpu.pipeline_mode<synchronous>, transform_indices = @transform_9, window_bounds = array<i64: 32, 32>}, {pipeline_mode = #tpu.pipeline_mode<synchronous>, transform_indices = @transform_10, window_bounds = array<i64: 1, 32>}, {pipeline_mode = #tpu.pipeline_mode<synchronous>, transform_indices = @transform_11, window_bounds = array<i64: 64, 256>}, {pipeline_mode = #tpu.pipeline_mode<synchronous>, transform_indices = @transform_12, window_bounds = array<i64: 32, 256>}, {pipeline_mode = #tpu.pipeline_mode<synchronous>, transform_indices = @transform_13, window_bounds = array<i64: 256, 32>}, {pipeline_mode = #tpu.pipeline_mode<synchronous>, transform_indices = @transform_14, window_bounds = array<i64: 1, 32>}, {pipeline_mode = #tpu.pipeline_mode<synchronous>, transform_indices = @transform_15, window_bounds = array<i64: 1, 32>}, {pipeline_mode = #tpu.pipeline_mode<synchronous>, transform_indices = @transform_16, window_bounds = array<i64: 32, 128>}, {pipeline_mode = #tpu.pipeline_mode<synchronous>, transform_indices = @transform_17, window_bounds = array<i64: 1, 128>}, {pipeline_mode = #tpu.pipeline_mode<synchronous>, transform_indices = @transform_18, window_bounds = array<i64: 128, 32>}, {pipeline_mode = #tpu.pipeline_mode<synchronous>, transform_indices = @transform_19, window_bounds = array<i64: 1, 32>}, {pipeline_mode = #tpu.pipeline_mode<synchronous>, transform_indices = @transform_20, window_bounds = array<i64: 128, 32>}]} {
    %c0 = arith.constant 0 : index
    %c0_0 = arith.constant 0 : index
    %0 = vector.load %arg1[%c0, %c0_0] : memref<128x32xf32, #tpu.memory_space<vmem>>, vector<128x32xf32>
    %c0_1 = arith.constant 0 : index
    %c0_2 = arith.constant 0 : index
    %1 = vector.load %arg13[%c0_1, %c0_2] : memref<32x256xf32, #tpu.memory_space<vmem>>, vector<32x256xf32>
    %c0_3 = arith.constant 0 : index
    %c0_4 = arith.constant 0 : index
    %2 = vector.load %arg14[%c0_3, %c0_4] : memref<256x32xf32, #tpu.memory_space<vmem>>, vector<256x32xf32>
    %3 = arith.truncf %2 : vector<256x32xf32> to vector<256x32xbf16>
    %4 = vector.extract_strided_slice %0 {offsets = [0, 0], sizes = [64, 32], strides = [1, 1]} : vector<128x32xf32> to vector<64x32xf32>
    %c0_5 = arith.constant 0 : index
    %c0_6 = arith.constant 0 : index
    %5 = vector.load %arg2[%c0_5, %c0_6] : memref<1x32xf32, #tpu.memory_space<vmem>>, vector<1x32xf32>
    %c0_7 = arith.constant 0 : index
    %c0_8 = arith.constant 0 : index
    %6 = vector.load %arg3[%c0_7, %c0_8] : memref<1x32xf32, #tpu.memory_space<vmem>>, vector<1x32xf32>
    %cst = arith.constant dense<0.000000e+00> : vector<64xf32>
    %7 = vector.multi_reduction <add>, %4, %cst [1] : vector<64x32xf32> to vector<64xf32>
    %8 = vector.shape_cast %7 : vector<64xf32> to vector<64x1xf32>
    %cst_9 = arith.constant 3.200000e+01 : f32
    %9 = vector.broadcast %cst_9 : f32 to vector<64x1xf32>
    %10 = arith.divf %8, %9 : vector<64x1xf32>
    %11 = vector.broadcast %10 : vector<64x1xf32> to vector<64x32xf32>
    %12 = arith.subf %4, %11 : vector<64x32xf32>
    %13 = arith.mulf %12, %12 : vector<64x32xf32>
    %cst_10 = arith.constant dense<0.000000e+00> : vector<64xf32>
    %14 = vector.multi_reduction <add>, %13, %cst_10 [1] : vector<64x32xf32> to vector<64xf32>
    %15 = vector.shape_cast %14 : vector<64xf32> to vector<64x1xf32>
    %cst_11 = arith.constant 3.200000e+01 : f32
    %16 = vector.broadcast %cst_11 : f32 to vector<64x1xf32>
    %17 = arith.divf %15, %16 : vector<64x1xf32>
    %cst_12 = arith.constant 9.99999974E-6 : f32
    %18 = vector.broadcast %cst_12 : f32 to vector<64x1xf32>
    %19 = arith.addf %17, %18 : vector<64x1xf32>
    %20 = math.rsqrt %19 : vector<64x1xf32>
    %21 = vector.broadcast %20 : vector<64x1xf32> to vector<64x32xf32>
    %22 = arith.mulf %12, %21 : vector<64x32xf32>
    %23 = vector.broadcast %5 : vector<1x32xf32> to vector<64x32xf32>
    %24 = arith.mulf %22, %23 : vector<64x32xf32>
    %25 = vector.broadcast %6 : vector<1x32xf32> to vector<64x32xf32>
    %26 = arith.addf %24, %25 : vector<64x32xf32>
    %27 = arith.truncf %26 : vector<64x32xf32> to vector<64x32xbf16>
    %c0_13 = arith.constant 0 : index
    %c0_14 = arith.constant 0 : index
    %28 = vector.load %arg4[%c0_13, %c0_14] : memref<32x32xbf16, #tpu.memory_space<vmem>>, vector<32x32xbf16>
    %cst_15 = arith.constant dense<0.000000e+00> : vector<64x32xf32>
    %29 = tpu.matmul %27, %28, %cst_15 {dimension_numbers = #tpu.dot_dimension_numbers<[1], [0], [0], [1], [0, 0, 1, 1], [], []>} : vector<64x32xbf16>, vector<32x32xbf16>, vector<64x32xf32> -> vector<64x32xf32>
    %c0_16 = arith.constant 0 : index
    %c0_17 = arith.constant 0 : index
    %30 = vector.load %arg5[%c0_16, %c0_17] : memref<1x32xf32, #tpu.memory_space<vmem>>, vector<1x32xf32>
    %31 = vector.broadcast %30 : vector<1x32xf32> to vector<64x32xf32>
    %32 = arith.addf %29, %31 : vector<64x32xf32>
    %c0_18 = arith.constant 0 : index
    %c0_19 = arith.constant 0 : index
    %33 = vector.load %arg6[%c0_18, %c0_19] : memref<32x32xbf16, #tpu.memory_space<vmem>>, vector<32x32xbf16>
    %cst_20 = arith.constant dense<0.000000e+00> : vector<32x64xf32>
    %34 = tpu.matmul %33, %27, %cst_20 {dimension_numbers = #tpu.dot_dimension_numbers<[1], [1], [0], [0], [0, 0, 1, 0], [], []>} : vector<32x32xbf16>, vector<64x32xbf16>, vector<32x64xf32> -> vector<32x64xf32>
    %c0_21 = arith.constant 0 : index
    %c0_22 = arith.constant 0 : index
    %35 = vector.load %arg7[%c0_21, %c0_22] : memref<32x1xf32, #tpu.memory_space<vmem>>, vector<32x1xf32>
    %36 = vector.broadcast %35 : vector<32x1xf32> to vector<32x64xf32>
    %37 = arith.addf %34, %36 : vector<32x64xf32>
    %c0_23 = arith.constant 0 : index
    %c0_24 = arith.constant 0 : index
    %38 = vector.load %arg8[%c0_23, %c0_24] : memref<32x32xbf16, #tpu.memory_space<vmem>>, vector<32x32xbf16>
    %cst_25 = arith.constant dense<0.000000e+00> : vector<64x32xf32>
    %39 = tpu.matmul %27, %38, %cst_25 {dimension_numbers = #tpu.dot_dimension_numbers<[1], [0], [0], [1], [0, 0, 1, 1], [], []>} : vector<64x32xbf16>, vector<32x32xbf16>, vector<64x32xf32> -> vector<64x32xf32>
    %c0_26 = arith.constant 0 : index
    %c0_27 = arith.constant 0 : index
    %40 = vector.load %arg9[%c0_26, %c0_27] : memref<1x32xf32, #tpu.memory_space<vmem>>, vector<1x32xf32>
    %41 = vector.broadcast %40 : vector<1x32xf32> to vector<64x32xf32>
    %42 = arith.addf %39, %41 : vector<64x32xf32>
    %43 = tpu.concatenate %37, %37, %37, %37 in 1 : vector<32x64xf32>, vector<32x64xf32>, vector<32x64xf32>, vector<32x64xf32> -> vector<32x256xf32>
    %44 = arith.mulf %43, %1 : vector<32x256xf32>
    %45 = arith.truncf %44 : vector<32x256xf32> to vector<32x256xbf16>
    %46 = tpu.concatenate %42, %42, %42, %42 in 0 : vector<64x32xf32>, vector<64x32xf32>, vector<64x32xf32>, vector<64x32xf32> -> vector<256x32xf32>
    %47 = arith.mulf %46, %2 : vector<256x32xf32>
    %48 = arith.truncf %47 : vector<256x32xf32> to vector<256x32xbf16>
    %49 = arith.truncf %32 : vector<64x32xf32> to vector<64x32xbf16>
    %cst_28 = arith.constant dense<0.000000e+00> : vector<64x256xf32>
    %50 = tpu.matmul %49, %45, %cst_28 {dimension_numbers = #tpu.dot_dimension_numbers<[1], [0], [0], [1], [0, 0, 1, 1], [], []>} : vector<64x32xbf16>, vector<32x256xbf16>, vector<64x256xf32> -> vector<64x256xf32>
    %c0_29 = arith.constant 0 : index
    %c0_30 = arith.constant 0 : index
    %51 = vector.load %arg12[%c0_29, %c0_30] : memref<64x256xf32, #tpu.memory_space<vmem>>, vector<64x256xf32>
    %52 = arith.addf %50, %51 : vector<64x256xf32>
    %cst_31 = arith.constant dense<0xFF800000> : vector<64xf32>
    %53 = vector.multi_reduction <maximumf>, %52, %cst_31 [1] : vector<64x256xf32> to vector<64xf32>
    %54 = vector.shape_cast %53 : vector<64xf32> to vector<64x1xf32>
    %55 = vector.broadcast %54 : vector<64x1xf32> to vector<64x256xf32>
    %56 = arith.subf %52, %55 : vector<64x256xf32>
    %57 = math.exp %56 : vector<64x256xf32>
    %58 = arith.truncf %57 : vector<64x256xf32> to vector<64x256xbf16>
    %cst_32 = arith.constant dense<0.000000e+00> : vector<64x32xf32>
    %59 = tpu.matmul %58, %48, %cst_32 {dimension_numbers = #tpu.dot_dimension_numbers<[1], [0], [0], [1], [0, 0, 1, 1], [], []>} : vector<64x256xbf16>, vector<256x32xbf16>, vector<64x32xf32> -> vector<64x32xf32>
    %cst_33 = arith.constant dense<0.000000e+00> : vector<64x32xf32>
    %60 = tpu.matmul %58, %3, %cst_33 {dimension_numbers = #tpu.dot_dimension_numbers<[1], [0], [0], [1], [0, 0, 1, 1], [], []>} : vector<64x256xbf16>, vector<256x32xbf16>, vector<64x32xf32> -> vector<64x32xf32>
    %61 = tpu.reciprocal %60 {approx = true} : vector<64x32xf32> -> vector<64x32xf32>
    %62 = arith.mulf %59, %61 : vector<64x32xf32>
    %63 = arith.truncf %62 : vector<64x32xf32> to vector<64x32xbf16>
    %c0_34 = arith.constant 0 : index
    %c0_35 = arith.constant 0 : index
    %64 = vector.load %arg10[%c0_34, %c0_35] : memref<32x32xbf16, #tpu.memory_space<vmem>>, vector<32x32xbf16>
    %cst_36 = arith.constant dense<0.000000e+00> : vector<64x32xf32>
    %65 = tpu.matmul %63, %64, %cst_36 {dimension_numbers = #tpu.dot_dimension_numbers<[1], [0], [0], [1], [0, 0, 1, 1], [], []>} : vector<64x32xbf16>, vector<32x32xbf16>, vector<64x32xf32> -> vector<64x32xf32>
    %66 = vector.extract_strided_slice %0 {offsets = [64, 0], sizes = [64, 32], strides = [1, 1]} : vector<128x32xf32> to vector<64x32xf32>
    %c0_37 = arith.constant 0 : index
    %c0_38 = arith.constant 0 : index
    %67 = vector.load %arg2[%c0_37, %c0_38] : memref<1x32xf32, #tpu.memory_space<vmem>>, vector<1x32xf32>
    %c0_39 = arith.constant 0 : index
    %c0_40 = arith.constant 0 : index
    %68 = vector.load %arg3[%c0_39, %c0_40] : memref<1x32xf32, #tpu.memory_space<vmem>>, vector<1x32xf32>
    %cst_41 = arith.constant dense<0.000000e+00> : vector<64xf32>
    %69 = vector.multi_reduction <add>, %66, %cst_41 [1] : vector<64x32xf32> to vector<64xf32>
    %70 = vector.shape_cast %69 : vector<64xf32> to vector<64x1xf32>
    %cst_42 = arith.constant 3.200000e+01 : f32
    %71 = vector.broadcast %cst_42 : f32 to vector<64x1xf32>
    %72 = arith.divf %70, %71 : vector<64x1xf32>
    %73 = vector.broadcast %72 : vector<64x1xf32> to vector<64x32xf32>
    %74 = arith.subf %66, %73 : vector<64x32xf32>
    %75 = arith.mulf %74, %74 : vector<64x32xf32>
    %cst_43 = arith.constant dense<0.000000e+00> : vector<64xf32>
    %76 = vector.multi_reduction <add>, %75, %cst_43 [1] : vector<64x32xf32> to vector<64xf32>
    %77 = vector.shape_cast %76 : vector<64xf32> to vector<64x1xf32>
    %cst_44 = arith.constant 3.200000e+01 : f32
    %78 = vector.broadcast %cst_44 : f32 to vector<64x1xf32>
    %79 = arith.divf %77, %78 : vector<64x1xf32>
    %cst_45 = arith.constant 9.99999974E-6 : f32
    %80 = vector.broadcast %cst_45 : f32 to vector<64x1xf32>
    %81 = arith.addf %79, %80 : vector<64x1xf32>
    %82 = math.rsqrt %81 : vector<64x1xf32>
    %83 = vector.broadcast %82 : vector<64x1xf32> to vector<64x32xf32>
    %84 = arith.mulf %74, %83 : vector<64x32xf32>
    %85 = vector.broadcast %67 : vector<1x32xf32> to vector<64x32xf32>
    %86 = arith.mulf %84, %85 : vector<64x32xf32>
    %87 = vector.broadcast %68 : vector<1x32xf32> to vector<64x32xf32>
    %88 = arith.addf %86, %87 : vector<64x32xf32>
    %89 = arith.truncf %88 : vector<64x32xf32> to vector<64x32xbf16>
    %c0_46 = arith.constant 0 : index
    %c0_47 = arith.constant 0 : index
    %90 = vector.load %arg4[%c0_46, %c0_47] : memref<32x32xbf16, #tpu.memory_space<vmem>>, vector<32x32xbf16>
    %cst_48 = arith.constant dense<0.000000e+00> : vector<64x32xf32>
    %91 = tpu.matmul %89, %90, %cst_48 {dimension_numbers = #tpu.dot_dimension_numbers<[1], [0], [0], [1], [0, 0, 1, 1], [], []>} : vector<64x32xbf16>, vector<32x32xbf16>, vector<64x32xf32> -> vector<64x32xf32>
    %c0_49 = arith.constant 0 : index
    %c0_50 = arith.constant 0 : index
    %92 = vector.load %arg5[%c0_49, %c0_50] : memref<1x32xf32, #tpu.memory_space<vmem>>, vector<1x32xf32>
    %93 = vector.broadcast %92 : vector<1x32xf32> to vector<64x32xf32>
    %94 = arith.addf %91, %93 : vector<64x32xf32>
    %c0_51 = arith.constant 0 : index
    %c0_52 = arith.constant 0 : index
    %95 = vector.load %arg6[%c0_51, %c0_52] : memref<32x32xbf16, #tpu.memory_space<vmem>>, vector<32x32xbf16>
    %cst_53 = arith.constant dense<0.000000e+00> : vector<32x64xf32>
    %96 = tpu.matmul %95, %89, %cst_53 {dimension_numbers = #tpu.dot_dimension_numbers<[1], [1], [0], [0], [0, 0, 1, 0], [], []>} : vector<32x32xbf16>, vector<64x32xbf16>, vector<32x64xf32> -> vector<32x64xf32>
    %c0_54 = arith.constant 0 : index
    %c0_55 = arith.constant 0 : index
    %97 = vector.load %arg7[%c0_54, %c0_55] : memref<32x1xf32, #tpu.memory_space<vmem>>, vector<32x1xf32>
    %98 = vector.broadcast %97 : vector<32x1xf32> to vector<32x64xf32>
    %99 = arith.addf %96, %98 : vector<32x64xf32>
    %c0_56 = arith.constant 0 : index
    %c0_57 = arith.constant 0 : index
    %100 = vector.load %arg8[%c0_56, %c0_57] : memref<32x32xbf16, #tpu.memory_space<vmem>>, vector<32x32xbf16>
    %cst_58 = arith.constant dense<0.000000e+00> : vector<64x32xf32>
    %101 = tpu.matmul %89, %100, %cst_58 {dimension_numbers = #tpu.dot_dimension_numbers<[1], [0], [0], [1], [0, 0, 1, 1], [], []>} : vector<64x32xbf16>, vector<32x32xbf16>, vector<64x32xf32> -> vector<64x32xf32>
    %c0_59 = arith.constant 0 : index
    %c0_60 = arith.constant 0 : index
    %102 = vector.load %arg9[%c0_59, %c0_60] : memref<1x32xf32, #tpu.memory_space<vmem>>, vector<1x32xf32>
    %103 = vector.broadcast %102 : vector<1x32xf32> to vector<64x32xf32>
    %104 = arith.addf %101, %103 : vector<64x32xf32>
    %105 = tpu.concatenate %99, %99, %99, %99 in 1 : vector<32x64xf32>, vector<32x64xf32>, vector<32x64xf32>, vector<32x64xf32> -> vector<32x256xf32>
    %106 = arith.mulf %105, %1 : vector<32x256xf32>
    %107 = arith.truncf %106 : vector<32x256xf32> to vector<32x256xbf16>
    %108 = tpu.concatenate %104, %104, %104, %104 in 0 : vector<64x32xf32>, vector<64x32xf32>, vector<64x32xf32>, vector<64x32xf32> -> vector<256x32xf32>
    %109 = arith.mulf %108, %2 : vector<256x32xf32>
    %110 = arith.truncf %109 : vector<256x32xf32> to vector<256x32xbf16>
    %111 = arith.truncf %94 : vector<64x32xf32> to vector<64x32xbf16>
    %cst_61 = arith.constant dense<0.000000e+00> : vector<64x256xf32>
    %112 = tpu.matmul %111, %107, %cst_61 {dimension_numbers = #tpu.dot_dimension_numbers<[1], [0], [0], [1], [0, 0, 1, 1], [], []>} : vector<64x32xbf16>, vector<32x256xbf16>, vector<64x256xf32> -> vector<64x256xf32>
    %c0_62 = arith.constant 0 : index
    %c0_63 = arith.constant 0 : index
    %113 = vector.load %arg12[%c0_62, %c0_63] : memref<64x256xf32, #tpu.memory_space<vmem>>, vector<64x256xf32>
    %114 = arith.addf %112, %113 : vector<64x256xf32>
    %cst_64 = arith.constant dense<0xFF800000> : vector<64xf32>
    %115 = vector.multi_reduction <maximumf>, %114, %cst_64 [1] : vector<64x256xf32> to vector<64xf32>
    %116 = vector.shape_cast %115 : vector<64xf32> to vector<64x1xf32>
    %117 = vector.broadcast %116 : vector<64x1xf32> to vector<64x256xf32>
    %118 = arith.subf %114, %117 : vector<64x256xf32>
    %119 = math.exp %118 : vector<64x256xf32>
    %120 = arith.truncf %119 : vector<64x256xf32> to vector<64x256xbf16>
    %cst_65 = arith.constant dense<0.000000e+00> : vector<64x32xf32>
    %121 = tpu.matmul %120, %110, %cst_65 {dimension_numbers = #tpu.dot_dimension_numbers<[1], [0], [0], [1], [0, 0, 1, 1], [], []>} : vector<64x256xbf16>, vector<256x32xbf16>, vector<64x32xf32> -> vector<64x32xf32>
    %cst_66 = arith.constant dense<0.000000e+00> : vector<64x32xf32>
    %122 = tpu.matmul %120, %3, %cst_66 {dimension_numbers = #tpu.dot_dimension_numbers<[1], [0], [0], [1], [0, 0, 1, 1], [], []>} : vector<64x256xbf16>, vector<256x32xbf16>, vector<64x32xf32> -> vector<64x32xf32>
    %123 = tpu.reciprocal %122 {approx = true} : vector<64x32xf32> -> vector<64x32xf32>
    %124 = arith.mulf %121, %123 : vector<64x32xf32>
    %125 = arith.truncf %124 : vector<64x32xf32> to vector<64x32xbf16>
    %c0_67 = arith.constant 0 : index
    %c0_68 = arith.constant 0 : index
    %126 = vector.load %arg10[%c0_67, %c0_68] : memref<32x32xbf16, #tpu.memory_space<vmem>>, vector<32x32xbf16>
    %cst_69 = arith.constant dense<0.000000e+00> : vector<64x32xf32>
    %127 = tpu.matmul %125, %126, %cst_69 {dimension_numbers = #tpu.dot_dimension_numbers<[1], [0], [0], [1], [0, 0, 1, 1], [], []>} : vector<64x32xbf16>, vector<32x32xbf16>, vector<64x32xf32> -> vector<64x32xf32>
    %128 = tpu.concatenate %65, %127 in 0 : vector<64x32xf32>, vector<64x32xf32> -> vector<128x32xf32>
    %129 = arith.addf %0, %128 : vector<128x32xf32>
    %c0_70 = arith.constant 0 : index
    %c0_71 = arith.constant 0 : index
    %130 = vector.load %arg11[%c0_70, %c0_71] : memref<1x32xf32, #tpu.memory_space<vmem>>, vector<1x32xf32>
    %131 = vector.broadcast %130 : vector<1x32xf32> to vector<128x32xf32>
    %132 = arith.addf %129, %131 : vector<128x32xf32>
    %c0_72 = arith.constant 0 : index
    %c0_73 = arith.constant 0 : index
    %133 = vector.load %arg15[%c0_72, %c0_73] : memref<1x32xf32, #tpu.memory_space<vmem>>, vector<1x32xf32>
    %c0_74 = arith.constant 0 : index
    %c0_75 = arith.constant 0 : index
    %134 = vector.load %arg16[%c0_74, %c0_75] : memref<1x32xf32, #tpu.memory_space<vmem>>, vector<1x32xf32>
    %cst_76 = arith.constant dense<0.000000e+00> : vector<128xf32>
    %135 = vector.multi_reduction <add>, %132, %cst_76 [1] : vector<128x32xf32> to vector<128xf32>
    %136 = vector.shape_cast %135 : vector<128xf32> to vector<128x1xf32>
    %cst_77 = arith.constant 3.200000e+01 : f32
    %137 = vector.broadcast %cst_77 : f32 to vector<128x1xf32>
    %138 = arith.divf %136, %137 : vector<128x1xf32>
    %139 = vector.broadcast %138 : vector<128x1xf32> to vector<128x32xf32>
    %140 = arith.subf %132, %139 : vector<128x32xf32>
    %141 = arith.mulf %140, %140 : vector<128x32xf32>
    %cst_78 = arith.constant dense<0.000000e+00> : vector<128xf32>
    %142 = vector.multi_reduction <add>, %141, %cst_78 [1] : vector<128x32xf32> to vector<128xf32>
    %143 = vector.shape_cast %142 : vector<128xf32> to vector<128x1xf32>
    %cst_79 = arith.constant 3.200000e+01 : f32
    %144 = vector.broadcast %cst_79 : f32 to vector<128x1xf32>
    %145 = arith.divf %143, %144 : vector<128x1xf32>
    %cst_80 = arith.constant 9.99999974E-6 : f32
    %146 = vector.broadcast %cst_80 : f32 to vector<128x1xf32>
    %147 = arith.addf %145, %146 : vector<128x1xf32>
    %148 = math.rsqrt %147 : vector<128x1xf32>
    %149 = vector.broadcast %148 : vector<128x1xf32> to vector<128x32xf32>
    %150 = arith.mulf %140, %149 : vector<128x32xf32>
    %151 = vector.broadcast %133 : vector<1x32xf32> to vector<128x32xf32>
    %152 = arith.mulf %150, %151 : vector<128x32xf32>
    %153 = vector.broadcast %134 : vector<1x32xf32> to vector<128x32xf32>
    %154 = arith.addf %152, %153 : vector<128x32xf32>
    %155 = arith.truncf %154 : vector<128x32xf32> to vector<128x32xbf16>
    %c0_81 = arith.constant 0 : index
    %c0_82 = arith.constant 0 : index
    %156 = vector.load %arg17[%c0_81, %c0_82] : memref<32x128xbf16, #tpu.memory_space<vmem>>, vector<32x128xbf16>
    %cst_83 = arith.constant dense<0.000000e+00> : vector<128x128xf32>
    %157 = tpu.matmul %155, %156, %cst_83 {dimension_numbers = #tpu.dot_dimension_numbers<[1], [0], [0], [1], [0, 0, 1, 1], [], []>} : vector<128x32xbf16>, vector<32x128xbf16>, vector<128x128xf32> -> vector<128x128xf32>
    %c0_84 = arith.constant 0 : index
    %c0_85 = arith.constant 0 : index
    %158 = vector.load %arg18[%c0_84, %c0_85] : memref<1x128xf32, #tpu.memory_space<vmem>>, vector<1x128xf32>
    %159 = vector.broadcast %158 : vector<1x128xf32> to vector<128x128xf32>
    %160 = arith.addf %157, %159 : vector<128x128xf32>
    %cst_86 = arith.constant 5.000000e-01 : f32
    %161 = vector.broadcast %cst_86 : f32 to vector<128x128xf32>
    %162 = arith.mulf %161, %160 : vector<128x128xf32>
    %cst_87 = arith.constant 4.471500e-02 : f32
    %163 = vector.broadcast %cst_87 : f32 to vector<128x128xf32>
    %164 = arith.mulf %163, %160 : vector<128x128xf32>
    %165 = arith.mulf %164, %160 : vector<128x128xf32>
    %166 = arith.mulf %165, %160 : vector<128x128xf32>
    %167 = arith.addf %160, %166 : vector<128x128xf32>
    %cst_88 = arith.constant 0.797884583 : f32
    %168 = vector.broadcast %cst_88 : f32 to vector<128x128xf32>
    %169 = arith.mulf %168, %167 : vector<128x128xf32>
    %170 = math.tanh %169 : vector<128x128xf32>
    %cst_89 = arith.constant 1.000000e+00 : f32
    %171 = vector.broadcast %cst_89 : f32 to vector<128x128xf32>
    %172 = arith.addf %171, %170 : vector<128x128xf32>
    %173 = arith.mulf %162, %172 : vector<128x128xf32>
    %174 = arith.truncf %173 : vector<128x128xf32> to vector<128x128xbf16>
    %c0_90 = arith.constant 0 : index
    %c0_91 = arith.constant 0 : index
    %175 = vector.load %arg19[%c0_90, %c0_91] : memref<128x32xbf16, #tpu.memory_space<vmem>>, vector<128x32xbf16>
    %cst_92 = arith.constant dense<0.000000e+00> : vector<128x32xf32>
    %176 = tpu.matmul %174, %175, %cst_92 {dimension_numbers = #tpu.dot_dimension_numbers<[1], [0], [0], [1], [0, 0, 1, 1], [], []>} : vector<128x128xbf16>, vector<128x32xbf16>, vector<128x32xf32> -> vector<128x32xf32>
    %c0_93 = arith.constant 0 : index
    %c0_94 = arith.constant 0 : index
    %177 = vector.load %arg20[%c0_93, %c0_94] : memref<1x32xf32, #tpu.memory_space<vmem>>, vector<1x32xf32>
    %178 = vector.broadcast %177 : vector<1x32xf32> to vector<128x32xf32>
    %179 = arith.addf %176, %178 : vector<128x32xf32>
    %180 = arith.addf %132, %179 : vector<128x32xf32>
    %c0_95 = arith.constant 0 : index
    %c0_96 = arith.constant 0 : index
    %181 = vector.load %arg21[%c0_95, %c0_96] : memref<128x32xf32, #tpu.memory_space<vmem>>, vector<128x32xf32>
    tpu.vector_store %arg21[%c0_95, %c0_96], %180 {strides = array<i32>} : memref<128x32xf32, #tpu.memory_space<vmem>>, vector<128x32xf32>,
    return
  }
  func.func @transform_0(%arg0: i32) -> (i32, i32) {
    %c0_i32 = arith.constant 0 : i32
    %c0_i32_0 = arith.constant 0 : i32
    %c0_i32_1 = arith.constant 0 : i32
    return %c0_i32, %c0_i32_0 : i32, i32
  }
  func.func @transform_1(%arg0: i32) -> (i32, i32) {
    %c0_i32 = arith.constant 0 : i32
    %c0_i32_0 = arith.constant 0 : i32
    %c0_i32_1 = arith.constant 0 : i32
    return %c0_i32, %c0_i32_0 : i32, i32
  }
  func.func @transform_2(%arg0: i32) -> (i32, i32) {
    %c0_i32 = arith.constant 0 : i32
    %c0_i32_0 = arith.constant 0 : i32
    %c0_i32_1 = arith.constant 0 : i32
    return %c0_i32, %c0_i32_0 : i32, i32
  }
  func.func @transform_3(%arg0: i32) -> (i32, i32) {
    %c0_i32 = arith.constant 0 : i32
    %c0_i32_0 = arith.constant 0 : i32
    %c0_i32_1 = arith.constant 0 : i32
    return %c0_i32, %c0_i32_0 : i32, i32
  }
  func.func @transform_4(%arg0: i32) -> (i32, i32) {
    %c0_i32 = arith.constant 0 : i32
    %c0_i32_0 = arith.constant 0 : i32
    %c0_i32_1 = arith.constant 0 : i32
    return %c0_i32, %c0_i32_0 : i32, i32
  }
  func.func @transform_5(%arg0: i32) -> (i32, i32) {
    %c0_i32 = arith.constant 0 : i32
    %c0_i32_0 = arith.constant 0 : i32
    %c0_i32_1 = arith.constant 0 : i32
    return %c0_i32, %c0_i32_0 : i32, i32
  }
  func.func @transform_6(%arg0: i32) -> (i32, i32) {
    %c0_i32 = arith.constant 0 : i32
    %c0_i32_0 = arith.constant 0 : i32
    %c0_i32_1 = arith.constant 0 : i32
    return %c0_i32, %c0_i32_0 : i32, i32
  }
  func.func @transform_7(%arg0: i32) -> (i32, i32) {
    %c0_i32 = arith.constant 0 : i32
    %c0_i32_0 = arith.constant 0 : i32
    %c0_i32_1 = arith.constant 0 : i32
    return %c0_i32, %c0_i32_0 : i32, i32
  }
  func.func @transform_8(%arg0: i32) -> (i32, i32) {
    %c0_i32 = arith.constant 0 : i32
    %c0_i32_0 = arith.constant 0 : i32
    %c0_i32_1 = arith.constant 0 : i32
    return %c0_i32, %c0_i32_0 : i32, i32
  }
  func.func @transform_9(%arg0: i32) -> (i32, i32) {
    %c0_i32 = arith.constant 0 : i32
    %c0_i32_0 = arith.constant 0 : i32
    %c0_i32_1 = arith.constant 0 : i32
    return %c0_i32, %c0_i32_0 : i32, i32
  }
  func.func @transform_10(%arg0: i32) -> (i32, i32) {
    %c0_i32 = arith.constant 0 : i32
    %c0_i32_0 = arith.constant 0 : i32
    %c0_i32_1 = arith.constant 0 : i32
    return %c0_i32, %c0_i32_0 : i32, i32
  }
  func.func @transform_11(%arg0: i32) -> (i32, i32) {
    %c0_i32 = arith.constant 0 : i32
    %c0_i32_0 = arith.constant 0 : i32
    %c0_i32_1 = arith.constant 0 : i32
    return %c0_i32, %c0_i32_0 : i32, i32
  }
  func.func @transform_12(%arg0: i32) -> (i32, i32) {
    %c0_i32 = arith.constant 0 : i32
    %c0_i32_0 = arith.constant 0 : i32
    %c0_i32_1 = arith.constant 0 : i32
    return %c0_i32, %c0_i32_0 : i32, i32
  }
  func.func @transform_13(%arg0: i32) -> (i32, i32) {
    %c0_i32 = arith.constant 0 : i32
    %c0_i32_0 = arith.constant 0 : i32
    %c0_i32_1 = arith.constant 0 : i32
    return %c0_i32, %c0_i32_0 : i32, i32
  }
  func.func @transform_14(%arg0: i32) -> (i32, i32) {
    %c0_i32 = arith.constant 0 : i32
    %c0_i32_0 = arith.constant 0 : i32
    %c0_i32_1 = arith.constant 0 : i32
    return %c0_i32, %c0_i32_0 : i32, i32
  }
  func.func @transform_15(%arg0: i32) -> (i32, i32) {
    %c0_i32 = arith.constant 0 : i32
    %c0_i32_0 = arith.constant 0 : i32
    %c0_i32_1 = arith.constant 0 : i32
    return %c0_i32, %c0_i32_0 : i32, i32
  }
  func.func @transform_16(%arg0: i32) -> (i32, i32) {
    %c0_i32 = arith.constant 0 : i32
    %c0_i32_0 = arith.constant 0 : i32
    %c0_i32_1 = arith.constant 0 : i32
    return %c0_i32, %c0_i32_0 : i32, i32
  }
  func.func @transform_17(%arg0: i32) -> (i32, i32) {
    %c0_i32 = arith.constant 0 : i32
    %c0_i32_0 = arith.constant 0 : i32
    %c0_i32_1 = arith.constant 0 : i32
    return %c0_i32, %c0_i32_0 : i32, i32
  }
  func.func @transform_18(%arg0: i32) -> (i32, i32) {
    %c0_i32 = arith.constant 0 : i32
    %c0_i32_0 = arith.constant 0 : i32
    %c0_i32_1 = arith.constant 0 : i32
    return %c0_i32, %c0_i32_0 : i32, i32
  }
  func.func @transform_19(%arg0: i32) -> (i32, i32) {
    %c0_i32 = arith.constant 0 : i32
    %c0_i32_0 = arith.constant 0 : i32
    %c0_i32_1 = arith.constant 0 : i32
    return %c0_i32, %c0_i32_0 : i32, i32
  }
  func.func @transform_20(%arg0: i32) -> (i32, i32) {
    %c0_i32 = arith.constant 0 : i32
    %c0_i32_0 = arith.constant 0 : i32
    %c0_i32_1 = arith.constant 0 : i32
    return %c0_i32, %c0_i32_0 : i32, i32
  }
}

</mosaic_0001>

<llo_original>
// kernel: tpu_custom_call.1
$region0: #{tpu_custom_call.1}
  #allocation0 [shape = 'u32[]', space=smem, size = 0x4, offset = 0x4, fixed_abs, tag = 'smem constant byte address 0x4 - core index']
  #allocation1 [shape = 'u32[72,128]{1,0:T(1,128)}', space=vmem, size = 0x9000, scoped, tag = 'internal scratch']
  %s0 = inlined_call_operand.vmem [shape: f32[128,32], index: 0, kind: input, shape index: {}]
  %s1 = inlined_call_operand.vmem [shape: f32[1,32], index: 1, kind: input, shape index: {}]
  %s2 = inlined_call_operand.vmem [shape: f32[1,32], index: 2, kind: input, shape index: {}]
  %s3 = inlined_call_operand.vmem [shape: bf16[32,32], index: 3, kind: input, shape index: {}]
  %s4 = inlined_call_operand.vmem [shape: f32[1,32], index: 4, kind: input, shape index: {}]
  %s5 = inlined_call_operand.vmem [shape: bf16[32,32], index: 5, kind: input, shape index: {}]
  %s6 = inlined_call_operand.vmem [shape: f32[32,1], index: 6, kind: input, shape index: {}]
  %s7 = inlined_call_operand.vmem [shape: bf16[32,32], index: 7, kind: input, shape index: {}]
  %s8 = inlined_call_operand.vmem [shape: f32[1,32], index: 8, kind: input, shape index: {}]
  %s9 = inlined_call_operand.vmem [shape: bf16[32,32], index: 9, kind: input, shape index: {}]
  %s10 = inlined_call_operand.vmem [shape: f32[1,32], index: 10, kind: input, shape index: {}]
  %s11 = inlined_call_operand.vmem [shape: f32[64,256], index: 11, kind: input, shape index: {}]
  %s12 = inlined_call_operand.vmem [shape: f32[32,256], index: 12, kind: input, shape index: {}]
  %s13 = inlined_call_operand.vmem [shape: f32[256,32], index: 13, kind: input, shape index: {}]
  %s14 = inlined_call_operand.vmem [shape: f32[1,32], index: 14, kind: input, shape index: {}]
  %s15 = inlined_call_operand.vmem [shape: f32[1,32], index: 15, kind: input, shape index: {}]
  %s16 = inlined_call_operand.vmem [shape: bf16[32,128], index: 16, kind: input, shape index: {}]
  %s17 = inlined_call_operand.vmem [shape: f32[1,128], index: 17, kind: input, shape index: {}]
  %s18 = inlined_call_operand.vmem [shape: bf16[128,32], index: 18, kind: input, shape index: {}]
  %s19 = inlined_call_operand.vmem [shape: f32[1,32], index: 19, kind: input, shape index: {}]
  %s20 = inlined_call_operand.vmem [shape: f32[128,32], index: 20, kind: output, shape index: {}]
  %s21 = sld [smem:[#allocation0]]
  $region90: #{tpu_custom_call.1} parent=0
    _
  %s23 = ssub.s32 1, %s21
  %s24 = scalar_select 0, %s23, %s21
  // Predicated region
  $region2: #{tpu_custom_call.1} parent=0 // pred_check
    _
  $region3: #{tpu_custom_call.1} parent=0 // pred_check_branch
    %26 = sbr.rel (0) target = $region5
  $region4: #{tpu_custom_call.1} parent=0 // pred_region
    _
  $region5: #{tpu_custom_call.1} parent=0 // pred_fallthru
    _
  // Predicated region
  $region6: #{tpu_custom_call.1} parent=0 // pred_check
    _
  $region7: #{tpu_custom_call.1} parent=0 // pred_check_branch
    %28 = sbr.rel (0) target = $region9
  $region8: #{tpu_custom_call.1} parent=0 // pred_region
    _
  $region9: #{tpu_custom_call.1} parent=0 // pred_fallthru
    _
  // Predicated region
  $region10: #{tpu_custom_call.1} parent=0 // pred_check
    _
  $region11: #{tpu_custom_call.1} parent=0 // pred_check_branch
    %30 = sbr.rel (0) target = $region13
  $region12: #{tpu_custom_call.1} parent=0 // pred_region
    _
  $region13: #{tpu_custom_call.1} parent=0 // pred_fallthru
    _
  // Predicated region
  $region14: #{tpu_custom_call.1} parent=0 // pred_check
    _
  $region15: #{tpu_custom_call.1} parent=0 // pred_check_branch
    %32 = sbr.rel (0) target = $region17
  $region16: #{tpu_custom_call.1} parent=0 // pred_region
    _
  $region17: #{tpu_custom_call.1} parent=0 // pred_fallthru
    _
  // Predicated region
  $region18: #{tpu_custom_call.1} parent=0 // pred_check
    _
  $region19: #{tpu_custom_call.1} parent=0 // pred_check_branch
    %34 = sbr.rel (0) target = $region21
  $region20: #{tpu_custom_call.1} parent=0 // pred_region
    _
  $region21: #{tpu_custom_call.1} parent=0 // pred_fallthru
    _
  // Predicated region
  $region22: #{tpu_custom_call.1} parent=0 // pred_check
    _
  $region23: #{tpu_custom_call.1} parent=0 // pred_check_branch
    %36 = sbr.rel (0) target = $region25
  $region24: #{tpu_custom_call.1} parent=0 // pred_region
    _
  $region25: #{tpu_custom_call.1} parent=0 // pred_fallthru
    _
  // Predicated region
  $region26: #{tpu_custom_call.1} parent=0 // pred_check
    _
  $region27: #{tpu_custom_call.1} parent=0 // pred_check_branch
    %38 = sbr.rel (0) target = $region29
  $region28: #{tpu_custom_call.1} parent=0 // pred_region
    _
  $region29: #{tpu_custom_call.1} parent=0 // pred_fallthru
    _
  // Predicated region
  $region30: #{tpu_custom_call.1} parent=0 // pred_check
    _
  $region31: #{tpu_custom_call.1} parent=0 // pred_check_branch
    %40 = sbr.rel (0) target = $region33
  $region32: #{tpu_custom_call.1} parent=0 // pred_region
    _
  $region33: #{tpu_custom_call.1} parent=0 // pred_fallthru
    _
  // Predicated region
  $region34: #{tpu_custom_call.1} parent=0 // pred_check
    _
  $region35: #{tpu_custom_call.1} parent=0 // pred_check_branch
    %42 = sbr.rel (0) target = $region37
  $region36: #{tpu_custom_call.1} parent=0 // pred_region
    _
  $region37: #{tpu_custom_call.1} parent=0 // pred_fallthru
    _
  // Predicated region
  $region38: #{tpu_custom_call.1} parent=0 // pred_check
    _
  $region39: #{tpu_custom_call.1} parent=0 // pred_check_branch
    %44 = sbr.rel (0) target = $region41
  $region40: #{tpu_custom_call.1} parent=0 // pred_region
    _
  $region41: #{tpu_custom_call.1} parent=0 // pred_fallthru
    _
  // Predicated region
  $region42: #{tpu_custom_call.1} parent=0 // pred_check
    _
  $region43: #{tpu_custom_call.1} parent=0 // pred_check_branch
    %46 = sbr.rel (0) target = $region45
  $region44: #{tpu_custom_call.1} parent=0 // pred_region
    _
  $region45: #{tpu_custom_call.1} parent=0 // pred_fallthru
    _
  // Predicated region
  $region46: #{tpu_custom_call.1} parent=0 // pred_check
    _
  $region47: #{tpu_custom_call.1} parent=0 // pred_check_branch
    %48 = sbr.rel (0) target = $region49
  $region48: #{tpu_custom_call.1} parent=0 // pred_region
    _
  $region49: #{tpu_custom_call.1} parent=0 // pred_fallthru
    _
  // Predicated region
  $region50: #{tpu_custom_call.1} parent=0 // pred_check
    _
  $region51: #{tpu_custom_call.1} parent=0 // pred_check_branch
    %50 = sbr.rel (0) target = $region53
  $region52: #{tpu_custom_call.1} parent=0 // pred_region
    _
  $region53: #{tpu_custom_call.1} parent=0 // pred_fallthru
    _
  // Predicated region
  $region54: #{tpu_custom_call.1} parent=0 // pred_check
    _
  $region55: #{tpu_custom_call.1} parent=0 // pred_check_branch
    %52 = sbr.rel (0) target = $region57
  $region56: #{tpu_custom_call.1} parent=0 // pred_region
    _
  $region57: #{tpu_custom_call.1} parent=0 // pred_fallthru
    _
  // Predicated region
  $region58: #{tpu_custom_call.1} parent=0 // pred_check
    _
  $region59: #{tpu_custom_call.1} parent=0 // pred_check_branch
    %54 = sbr.rel (0) target = $region61
  $region60: #{tpu_custom_call.1} parent=0 // pred_region
    _
  $region61: #{tpu_custom_call.1} parent=0 // pred_fallthru
    _
  // Predicated region
  $region62: #{tpu_custom_call.1} parent=0 // pred_check
    _
  $region63: #{tpu_custom_call.1} parent=0 // pred_check_branch
    %56 = sbr.rel (0) target = $region65
  $region64: #{tpu_custom_call.1} parent=0 // pred_region
    _
  $region65: #{tpu_custom_call.1} parent=0 // pred_fallthru
    _
  // Predicated region
  $region66: #{tpu_custom_call.1} parent=0 // pred_check
    _
  $region67: #{tpu_custom_call.1} parent=0 // pred_check_branch
    %58 = sbr.rel (0) target = $region69
  $region68: #{tpu_custom_call.1} parent=0 // pred_region
    _
  $region69: #{tpu_custom_call.1} parent=0 // pred_fallthru
    _
  // Predicated region
  $region70: #{tpu_custom_call.1} parent=0 // pred_check
    _
  $region71: #{tpu_custom_call.1} parent=0 // pred_check_branch
    %60 = sbr.rel (0) target = $region73
  $region72: #{tpu_custom_call.1} parent=0 // pred_region
    _
  $region73: #{tpu_custom_call.1} parent=0 // pred_fallthru
    _
  // Predicated region
  $region74: #{tpu_custom_call.1} parent=0 // pred_check
    _
  $region75: #{tpu_custom_call.1} parent=0 // pred_check_branch
    %62 = sbr.rel (0) target = $region77
  $region76: #{tpu_custom_call.1} parent=0 // pred_region
    _
  $region77: #{tpu_custom_call.1} parent=0 // pred_fallthru
    _
  // Predicated region
  $region78: #{tpu_custom_call.1} parent=0 // pred_check
    _
  $region79: #{tpu_custom_call.1} parent=0 // pred_check_branch
    %64 = sbr.rel (0) target = $region81
  $region80: #{tpu_custom_call.1} parent=0 // pred_region
    _
  $region81: #{tpu_custom_call.1} parent=0 // pred_fallthru
    _
  %v66 = vld [vmem:[%s0] sm:$0xff]
  %v67 = vld [vmem:[%s0 + $0x8] sm:$0xff]
  %v68 = vld [vmem:[%s0 + $0x10] sm:$0xff]
  %v69 = vld [vmem:[%s0 + $0x18] sm:$0xff]
  %v70 = vld [vmem:[%s0 + $0x20] sm:$0xff]
  %v71 = vld [vmem:[%s0 + $0x28] sm:$0xff]
  %v72 = vld [vmem:[%s0 + $0x30] sm:$0xff]
  %v73 = vld [vmem:[%s0 + $0x38] sm:$0xff]
  %v74 = vld [vmem:[%s0 + $0x40] sm:$0xff]
  %v75 = vld [vmem:[%s0 + $0x48] sm:$0xff]
  %v76 = vld [vmem:[%s0 + $0x50] sm:$0xff]
  %v77 = vld [vmem:[%s0 + $0x58] sm:$0xff]
  %v78 = vld [vmem:[%s0 + $0x60] sm:$0xff]
  %v79 = vld [vmem:[%s0 + $0x68] sm:$0xff]
  %v80 = vld [vmem:[%s0 + $0x70] sm:$0xff]
  %v81 = vld [vmem:[%s0 + $0x78] sm:$0xff]
  %v82 = vld [vmem:[%s12] sm:$0xff]
  %v83 = vld [vmem:[%s12 + $0x8] sm:$0xff]
  %v84 = vld [vmem:[%s12 + $0x10] sm:$0xff]
  %v85 = vld [vmem:[%s12 + $0x18] sm:$0xff]
  %v86 = vld [vmem:[%s12 + $0x20] sm:$0xff]
  %v87 = vld [vmem:[%s12 + $0x28] sm:$0xff]
  %v88 = vld [vmem:[%s12 + $0x30] sm:$0xff]
  %v89 = vld [vmem:[%s12 + $0x38] sm:$0xff]
  %v90 = vld [vmem:[%s13] sm:$0xff]
  %v91 = vld [vmem:[%s13 + $0x8] sm:$0xff]
  %v92 = vld [vmem:[%s13 + $0x10] sm:$0xff]
  %v93 = vld [vmem:[%s13 + $0x18] sm:$0xff]
  %v94 = vld [vmem:[%s13 + $0x20] sm:$0xff]
  %v95 = vld [vmem:[%s13 + $0x28] sm:$0xff]
  %v96 = vld [vmem:[%s13 + $0x30] sm:$0xff]
  %v97 = vld [vmem:[%s13 + $0x38] sm:$0xff]
  %v98 = vld [vmem:[%s13 + $0x40] sm:$0xff]
  %v99 = vld [vmem:[%s13 + $0x48] sm:$0xff]
  %v100 = vld [vmem:[%s13 + $0x50] sm:$0xff]
  %v101 = vld [vmem:[%s13 + $0x58] sm:$0xff]
  %v102 = vld [vmem:[%s13 + $0x60] sm:$0xff]
  %v103 = vld [vmem:[%s13 + $0x68] sm:$0xff]
  %v104 = vld [vmem:[%s13 + $0x70] sm:$0xff]
  %v105 = vld [vmem:[%s13 + $0x78] sm:$0xff]
  %v106 = vld [vmem:[%s13 + $0x80] sm:$0xff]
  %v107 = vld [vmem:[%s13 + $0x88] sm:$0xff]
  %v108 = vld [vmem:[%s13 + $0x90] sm:$0xff]
  %v109 = vld [vmem:[%s13 + $0x98] sm:$0xff]
  %v110 = vld [vmem:[%s13 + $0xa0] sm:$0xff]
  %v111 = vld [vmem:[%s13 + $0xa8] sm:$0xff]
  %v112 = vld [vmem:[%s13 + $0xb0] sm:$0xff]
  %v113 = vld [vmem:[%s13 + $0xb8] sm:$0xff]
  %v114 = vld [vmem:[%s13 + $0xc0] sm:$0xff]
  %v115 = vld [vmem:[%s13 + $0xc8] sm:$0xff]
  %v116 = vld [vmem:[%s13 + $0xd0] sm:$0xff]
  %v117 = vld [vmem:[%s13 + $0xd8] sm:$0xff]
  %v118 = vld [vmem:[%s13 + $0xe0] sm:$0xff]
  %v119 = vld [vmem:[%s13 + $0xe8] sm:$0xff]
  %v120 = vld [vmem:[%s13 + $0xf0] sm:$0xff]
  %v121 = vld [vmem:[%s13 + $0xf8] sm:$0xff]
  %v122 = vpack.c.bf16 %v91, %v90
  %v123 = vpack.c.bf16 %v93, %v92
  %v124 = vpack.c.bf16 %v95, %v94
  %v125 = vpack.c.bf16 %v97, %v96
  %v126 = vpack.c.bf16 %v99, %v98
  %v127 = vpack.c.bf16 %v101, %v100
  %v128 = vpack.c.bf16 %v103, %v102
  %v129 = vpack.c.bf16 %v105, %v104
  %v130 = vpack.c.bf16 %v107, %v106
  %v131 = vpack.c.bf16 %v109, %v108
  %v132 = vpack.c.bf16 %v111, %v110
  %v133 = vpack.c.bf16 %v113, %v112
  %v134 = vpack.c.bf16 %v115, %v114
  %v135 = vpack.c.bf16 %v117, %v116
  %v136 = vpack.c.bf16 %v119, %v118
  %v137 = vpack.c.bf16 %v121, %v120
  %v138 = vld [vmem:[%s1] sm:$0x1]
  %v139 = vld [vmem:[%s2] sm:$0x1]
  %vm140 = vcmask 261120
  %v141 = vsel %vm140, %v66, 0.0
  %142 = vadd.xlane.f32.xlu0 %v141
  %v143 = vpop.xlane.xlu0 %142
  %v144 = vsel %vm140, %v67, 0.0
  %145 = vadd.xlane.f32.xlu0 %v144
  %v146 = vpop.xlane.xlu0 %145
  %v147 = vsel %vm140, %v68, 0.0
  %148 = vadd.xlane.f32.xlu0 %v147
  %v149 = vpop.xlane.xlu0 %148
  %v150 = vsel %vm140, %v69, 0.0
  %151 = vadd.xlane.f32.xlu0 %v150
  %v152 = vpop.xlane.xlu0 %151
  %v153 = vsel %vm140, %v70, 0.0
  %154 = vadd.xlane.f32.xlu0 %v153
  %v155 = vpop.xlane.xlu0 %154
  %v156 = vsel %vm140, %v71, 0.0
  %157 = vadd.xlane.f32.xlu0 %v156
  %v158 = vpop.xlane.xlu0 %157
  %v159 = vsel %vm140, %v72, 0.0
  %160 = vadd.xlane.f32.xlu0 %v159
  %v161 = vpop.xlane.xlu0 %160
  %v162 = vsel %vm140, %v73, 0.0
  %163 = vadd.xlane.f32.xlu0 %v162
  %v164 = vpop.xlane.xlu0 %163
  %v165 = vrcp.pop 32.0
  %v166 = vmul.f32 32.0, %v165
  %v167 = vsub.f32 1.0, %v166
  %v168 = vmul.f32 %v165, %v167
  %v169 = vadd.f32 %v165, %v168
  %vm170 = vweird.f32 %v165
  %v171 = vsel %vm170, %v165, %v169
  %v172 = vmul.f32 %v143, %v171
  %v173 = vmul.f32 %v146, %v171
  %v174 = vmul.f32 %v149, %v171
  %v175 = vmul.f32 %v152, %v171
  %v176 = vmul.f32 %v155, %v171
  %v177 = vmul.f32 %v158, %v171
  %v178 = vmul.f32 %v161, %v171
  %v179 = vmul.f32 %v164, %v171
  %v180 = vsub.f32 %v66, %v172
  %v181 = vsub.f32 %v67, %v173
  %v182 = vsub.f32 %v68, %v174
  %v183 = vsub.f32 %v69, %v175
  %v184 = vsub.f32 %v70, %v176
  %v185 = vsub.f32 %v71, %v177
  %v186 = vsub.f32 %v72, %v178
  %v187 = vsub.f32 %v73, %v179
  %v188 = vmul.f32 %v180, %v180
  %v189 = vmul.f32 %v181, %v181
  %v190 = vmul.f32 %v182, %v182
  %v191 = vmul.f32 %v183, %v183
  %v192 = vmul.f32 %v184, %v184
  %v193 = vmul.f32 %v185, %v185
  %v194 = vmul.f32 %v186, %v186
  %v195 = vmul.f32 %v187, %v187
  %v196 = vsel %vm140, %v188, 0.0
  %197 = vadd.xlane.f32.xlu0 %v196
  %v198 = vpop.xlane.xlu0 %197
  %v199 = vsel %vm140, %v189, 0.0
  %200 = vadd.xlane.f32.xlu0 %v199
  %v201 = vpop.xlane.xlu0 %200
  %v202 = vsel %vm140, %v190, 0.0
  %203 = vadd.xlane.f32.xlu0 %v202
  %v204 = vpop.xlane.xlu0 %203
  %v205 = vsel %vm140, %v191, 0.0
  %206 = vadd.xlane.f32.xlu0 %v205
  %v207 = vpop.xlane.xlu0 %206
  %v208 = vsel %vm140, %v192, 0.0
  %209 = vadd.xlane.f32.xlu0 %v208
  %v210 = vpop.xlane.xlu0 %209
  %v211 = vsel %vm140, %v193, 0.0
  %212 = vadd.xlane.f32.xlu0 %v211
  %v213 = vpop.xlane.xlu0 %212
  %v214 = vsel %vm140, %v194, 0.0
  %215 = vadd.xlane.f32.xlu0 %v214
  %v216 = vpop.xlane.xlu0 %215
  %v217 = vsel %vm140, %v195, 0.0
  %218 = vadd.xlane.f32.xlu0 %v217
  %v219 = vpop.xlane.xlu0 %218
  %v220 = vmul.f32 %v198, %v171
  %v221 = vmul.f32 %v201, %v171
  %v222 = vmul.f32 %v204, %v171
  %v223 = vmul.f32 %v207, %v171
  %v224 = vmul.f32 %v210, %v171
  %v225 = vmul.f32 %v213, %v171
  %v226 = vmul.f32 %v216, %v171
  %v227 = vmul.f32 %v219, %v171
  %v228 = vadd.f32 %v220, 1e-05
  %v229 = vadd.f32 %v221, 1e-05
  %v230 = vadd.f32 %v222, 1e-05
  %v231 = vadd.f32 %v223, 1e-05
  %v232 = vadd.f32 %v224, 1e-05
  %v233 = vadd.f32 %v225, 1e-05
  %v234 = vadd.f32 %v226, 1e-05
  %v235 = vadd.f32 %v227, 1e-05
  %v236 = vrsqrt.pop %v228
  %v237 = vmul.f32 %v236, %v228
  %v238 = vmul.f32 %v237, %v236
  %v239 = vmul.f32 0.5, %v238
  %v240 = vsub.f32 1.5, %v239
  %v241 = vmul.f32 %v236, %v240
  %vm242 = vweird.f32 %v228
  %vm243 = vweird.f32 %v236
  %vm244 = vmor %vm242, %vm243
  %v245 = vsel %vm244, %v236, %v241
  %v246 = vrsqrt.pop %v229
  %v247 = vmul.f32 %v246, %v229
  %v248 = vmul.f32 %v247, %v246
  %v249 = vmul.f32 0.5, %v248
  %v250 = vsub.f32 1.5, %v249
  %v251 = vmul.f32 %v246, %v250
  %vm252 = vweird.f32 %v229
  %vm253 = vweird.f32 %v246
  %vm254 = vmor %vm252, %vm253
  %v255 = vsel %vm254, %v246, %v251
  %v256 = vrsqrt.pop %v230
  %v257 = vmul.f32 %v256, %v230
  %v258 = vmul.f32 %v257, %v256
  %v259 = vmul.f32 0.5, %v258
  %v260 = vsub.f32 1.5, %v259
  %v261 = vmul.f32 %v256, %v260
  %vm262 = vweird.f32 %v230
  %vm263 = vweird.f32 %v256
  %vm264 = vmor %vm262, %vm263
  %v265 = vsel %vm264, %v256, %v261
  %v266 = vrsqrt.pop %v231
  %v267 = vmul.f32 %v266, %v231
  %v268 = vmul.f32 %v267, %v266
  %v269 = vmul.f32 0.5, %v268
  %v270 = vsub.f32 1.5, %v269
  %v271 = vmul.f32 %v266, %v270
  %vm272 = vweird.f32 %v231
  %vm273 = vweird.f32 %v266
  %vm274 = vmor %vm272, %vm273
  %v275 = vsel %vm274, %v266, %v271
  %v276 = vrsqrt.pop %v232
  %v277 = vmul.f32 %v276, %v232
  %v278 = vmul.f32 %v277, %v276
  %v279 = vmul.f32 0.5, %v278
  %v280 = vsub.f32 1.5, %v279
  %v281 = vmul.f32 %v276, %v280
  %vm282 = vweird.f32 %v232
  %vm283 = vweird.f32 %v276
  %vm284 = vmor %vm282, %vm283
  %v285 = vsel %vm284, %v276, %v281
  %v286 = vrsqrt.pop %v233
  %v287 = vmul.f32 %v286, %v233
  %v288 = vmul.f32 %v287, %v286
  %v289 = vmul.f32 0.5, %v288
  %v290 = vsub.f32 1.5, %v289
  %v291 = vmul.f32 %v286, %v290
  %vm292 = vweird.f32 %v233
  %vm293 = vweird.f32 %v286
  %vm294 = vmor %vm292, %vm293
  %v295 = vsel %vm294, %v286, %v291
  %v296 = vrsqrt.pop %v234
  %v297 = vmul.f32 %v296, %v234
  %v298 = vmul.f32 %v297, %v296
  %v299 = vmul.f32 0.5, %v298
  %v300 = vsub.f32 1.5, %v299
  %v301 = vmul.f32 %v296, %v300
  %vm302 = vweird.f32 %v234
  %vm303 = vweird.f32 %v296
  %vm304 = vmor %vm302, %vm303
  %v305 = vsel %vm304, %v296, %v301
  %v306 = vrsqrt.pop %v235
  %v307 = vmul.f32 %v306, %v235
  %v308 = vmul.f32 %v307, %v306
  %v309 = vmul.f32 0.5, %v308
  %v310 = vsub.f32 1.5, %v309
  %v311 = vmul.f32 %v306, %v310
  %vm312 = vweird.f32 %v235
  %vm313 = vweird.f32 %v306
  %vm314 = vmor %vm312, %vm313
  %v315 = vsel %vm314, %v306, %v311
  %v316 = vmul.f32 %v180, %v245
  %v317 = vmul.f32 %v181, %v255
  %v318 = vmul.f32 %v182, %v265
  %v319 = vmul.f32 %v183, %v275
  %v320 = vmul.f32 %v184, %v285
  %v321 = vmul.f32 %v185, %v295
  %v322 = vmul.f32 %v186, %v305
  %v323 = vmul.f32 %v187, %v315
  %v325 = vperm.slane %v138, 0
  %v327 = vmul.f32 %v316, %v325
  %v328 = vmul.f32 %v317, %v325
  %v329 = vmul.f32 %v318, %v325
  %v330 = vmul.f32 %v319, %v325
  %v331 = vmul.f32 %v320, %v325
  %v332 = vmul.f32 %v321, %v325
  %v333 = vmul.f32 %v322, %v325
  %v334 = vmul.f32 %v323, %v325
  %v336 = vperm.slane %v139, 0
  %v338 = vadd.f32 %v327, %v336
  %v339 = vadd.f32 %v328, %v336
  %v340 = vadd.f32 %v329, %v336
  %v341 = vadd.f32 %v330, %v336
  %v342 = vadd.f32 %v331, %v336
  %v343 = vadd.f32 %v332, %v336
  %v344 = vadd.f32 %v333, %v336
  %v345 = vadd.f32 %v334, %v336
  %v346 = vpack.c.bf16 %v339, %v338
  %v347 = vpack.c.bf16 %v341, %v340
  %v348 = vpack.c.bf16 %v343, %v342
  %v349 = vpack.c.bf16 %v345, %v344
  %v350 = vld [vmem:[%s3] sm:$0xf]
  %v351 = vld [vmem:[%s3 + $0x4] sm:$0xf]
  %v352 = vld [vmem:[%s3 + $0x8] sm:$0xf]
  %v353 = vld [vmem:[%s3 + $0xc] sm:$0xf]
  %v354 = vld [vmem:[%s4] sm:$0x1]
  %v356 = vperm.slane %v354, 0
  %v362 = vunpack.c.l.b16 %v350
  %v363 = vunpack.c.l.b16 %v351
  %v364 = vunpack.c.l.b16 %v352
  %v365 = vunpack.c.l.b16 %v353
  %v366 = vpack.c.b16 %v363, %v362
  %v367 = vpack.c.b16 %v365, %v364
  %v371 = vsel %vm140, %v346, 0
  %v374 = vsel %vm140, %v347, 0
  %v377 = vsel %vm140, %v348, 0
  %v380 = vsel %vm140, %v349, 0
  %382 = vmatpush.bf16.msra.mxu0 0
  %383 = vmatpush.bf16.msra.mxu0 0
  %384 = vmatpush.bf16.msra.mxu0 0
  %385 = vmatpush.bf16.msra.mxu0 0
  %386 = vmatpush.bf16.msra.mxu0 0
  %387 = vmatpush.bf16.msra.mxu0 0
  %388 = vmatpush.bf16.msra.mxu0 %v367
  %389 = vmatpush.bf16.msra.mxu0 %v366
  %390 = vmatmul.bf16.gmra.mxu0 %v371
  %v391 = vpop.f32.mrf.mxu0
  %v392 = vadd.f32 %v356, %v391
  %v393 = vpop.f32.mrf.mxu0
  %v394 = vadd.f32 %v356, %v393
  %395 = vmatmul.bf16.gmra.mxu0 %v374
  %v396 = vpop.f32.mrf.mxu0
  %v397 = vadd.f32 %v356, %v396
  %v398 = vpop.f32.mrf.mxu0
  %v399 = vadd.f32 %v356, %v398
  %400 = vmatmul.bf16.gmra.mxu0 %v377
  %v401 = vpop.f32.mrf.mxu0
  %v402 = vadd.f32 %v356, %v401
  %v403 = vpop.f32.mrf.mxu0
  %v404 = vadd.f32 %v356, %v403
  %405 = vmatmul.bf16.gmra.mxu0 %v380
  %v406 = vpop.f32.mrf.mxu0
  %v407 = vadd.f32 %v356, %v406
  %v408 = vpop.f32.mrf.mxu0
  %v409 = vadd.f32 %v356, %v408
  %410 = vdwg.mxu0
  %v411 = vld [vmem:[%s5] sm:$0xf]
  %v412 = vld [vmem:[%s5 + $0x4] sm:$0xf]
  %v413 = vld [vmem:[%s5 + $0x8] sm:$0xf]
  %v414 = vld [vmem:[%s5 + $0xc] sm:$0xf]
  %v415 = vld [vmem:[%s6] sm:$0xff]
  %v416 = vld [vmem:[%s6 + $0x8] sm:$0xff]
  %v417 = vld [vmem:[%s6 + $0x10] sm:$0xff]
  %v418 = vld [vmem:[%s6 + $0x18] sm:$0xff]
  %420 = vset.pattern.permute.xlu0 0
  %421 = vperm.xlu0 %420, %v415
  %v422 = vpop.permute.xlu0 %421
  %425 = vset.pattern.permute.xlu0 0
  %426 = vperm.xlu0 %425, %v416
  %v427 = vpop.permute.xlu0 %426
  %430 = vset.pattern.permute.xlu0 0
  %431 = vperm.xlu0 %430, %v417
  %v432 = vpop.permute.xlu0 %431
  %435 = vset.pattern.permute.xlu0 0
  %436 = vperm.xlu0 %435, %v418
  %v437 = vpop.permute.xlu0 %436
  %v443 = vunpack.c.l.b16 %v411
  %v444 = vunpack.c.l.b16 %v412
  %v445 = vunpack.c.l.b16 %v413
  %v446 = vunpack.c.l.b16 %v414
  %v447 = vpack.c.b16 %v444, %v443
  %v448 = vpack.c.b16 %v446, %v445
  %v450 = vsel %vm140, %v447, 0
  %v453 = vsel %vm140, %v448, 0
  %455 = vmatpush.bf16.xpose.msra.mxu0 0
  %456 = vmatpush.bf16.xpose.msra.mxu0 0
  %457 = vmatpush.bf16.xpose.msra.mxu0 0
  %458 = vmatpush.bf16.xpose.msra.mxu0 0
  %459 = vmatpush.bf16.xpose.msra.mxu0 %v380
  %460 = vmatpush.bf16.xpose.msra.mxu0 %v377
  %461 = vmatpush.bf16.xpose.msra.mxu0 %v374
  %462 = vmatpush.bf16.xpose.msra.mxu0 %v371
  %463 = vmatmul.bf16.gmra.mxu0 %v450
  %v464 = vpop.f32.mrf.mxu0
  %v465 = vadd.f32 %v422, %v464
  %v466 = vpop.f32.mrf.mxu0
  %v467 = vadd.f32 %v427, %v466
  %468 = vmatmul.bf16.gmra.mxu0 %v453
  %v469 = vpop.f32.mrf.mxu0
  %v470 = vadd.f32 %v432, %v469
  %v471 = vpop.f32.mrf.mxu0
  %v472 = vadd.f32 %v437, %v471
  %473 = vdwg.mxu0
  %v474 = vld [vmem:[%s7] sm:$0xf]
  %v475 = vld [vmem:[%s7 + $0x4] sm:$0xf]
  %v476 = vld [vmem:[%s7 + $0x8] sm:$0xf]
  %v477 = vld [vmem:[%s7 + $0xc] sm:$0xf]
  %v478 = vld [vmem:[%s8] sm:$0x1]
  %v480 = vperm.slane %v478, 0
  %v486 = vunpack.c.l.b16 %v474
  %v487 = vunpack.c.l.b16 %v475
  %v488 = vunpack.c.l.b16 %v476
  %v489 = vunpack.c.l.b16 %v477
  %v490 = vpack.c.b16 %v487, %v486
  %v491 = vpack.c.b16 %v489, %v488
  %494 = vmatpush.bf16.msra.mxu0 0
  %495 = vmatpush.bf16.msra.mxu0 0
  %496 = vmatpush.bf16.msra.mxu0 0
  %497 = vmatpush.bf16.msra.mxu0 0
  %498 = vmatpush.bf16.msra.mxu0 0
  %499 = vmatpush.bf16.msra.mxu0 0
  %500 = vmatpush.bf16.msra.mxu0 %v491
  %501 = vmatpush.bf16.msra.mxu0 %v490
  %502 = vmatmul.bf16.gmra.mxu0 %v371
  %v503 = vpop.f32.mrf.mxu0
  %v504 = vadd.f32 %v480, %v503
  %v505 = vpop.f32.mrf.mxu0
  %v506 = vadd.f32 %v480, %v505
  %507 = vmatmul.bf16.gmra.mxu0 %v374
  %v508 = vpop.f32.mrf.mxu0
  %v509 = vadd.f32 %v480, %v508
  %v510 = vpop.f32.mrf.mxu0
  %v511 = vadd.f32 %v480, %v510
  %512 = vmatmul.bf16.gmra.mxu0 %v377
  %v513 = vpop.f32.mrf.mxu0
  %v514 = vadd.f32 %v480, %v513
  %v515 = vpop.f32.mrf.mxu0
  %v516 = vadd.f32 %v480, %v515
  %517 = vmatmul.bf16.gmra.mxu0 %v380
  %v518 = vpop.f32.mrf.mxu0
  %v519 = vadd.f32 %v480, %v518
  %v520 = vpop.f32.mrf.mxu0
  %v521 = vadd.f32 %v480, %v520
  %522 = vdwg.mxu0
  %527 = vrot.lane.b32.xlu0 %v465, 64
  %v528 = vpop.permute.xlu0 %527
  %529 = vrot.lane.b32.xlu0 %v467, 64
  %v530 = vpop.permute.xlu0 %529
  %531 = vrot.lane.b32.xlu0 %v470, 64
  %v532 = vpop.permute.xlu0 %531
  %533 = vrot.lane.b32.xlu0 %v472, 64
  %v534 = vpop.permute.xlu0 %533
  %vm539 = vcmask 523264
  %v540 = vsel %vm539, %v465, %v528
  %v541 = vsel %vm539, %v467, %v530
  %v542 = vsel %vm539, %v470, %v532
  %v543 = vsel %vm539, %v472, %v534
  %v544 = vmul.f32 %v540, %v82
  %v545 = vmul.f32 %v540, %v83
  %v546 = vmul.f32 %v541, %v84
  %v547 = vmul.f32 %v541, %v85
  %v548 = vmul.f32 %v542, %v86
  %v549 = vmul.f32 %v542, %v87
  %v550 = vmul.f32 %v543, %v88
  %v551 = vmul.f32 %v543, %v89
  %v552 = vpack.c.bf16 %v546, %v544
  %v553 = vpack.c.bf16 %v547, %v545
  %v554 = vpack.c.bf16 %v550, %v548
  %v555 = vpack.c.bf16 %v551, %v549
  %v556 = vmul.f32 %v504, %v90
  %v557 = vmul.f32 %v506, %v91
  %v558 = vmul.f32 %v509, %v92
  %v559 = vmul.f32 %v511, %v93
  %v560 = vmul.f32 %v514, %v94
  %v561 = vmul.f32 %v516, %v95
  %v562 = vmul.f32 %v519, %v96
  %v563 = vmul.f32 %v521, %v97
  %v564 = vmul.f32 %v504, %v98
  %v565 = vmul.f32 %v506, %v99
  %v566 = vmul.f32 %v509, %v100
  %v567 = vmul.f32 %v511, %v101
  %v568 = vmul.f32 %v514, %v102
  %v569 = vmul.f32 %v516, %v103
  %v570 = vmul.f32 %v519, %v104
  %v571 = vmul.f32 %v521, %v105
  %v572 = vmul.f32 %v504, %v106
  %v573 = vmul.f32 %v506, %v107
  %v574 = vmul.f32 %v509, %v108
  %v575 = vmul.f32 %v511, %v109
  %v576 = vmul.f32 %v514, %v110
  %v577 = vmul.f32 %v516, %v111
  %v578 = vmul.f32 %v519, %v112
  %v579 = vmul.f32 %v521, %v113
  %v580 = vmul.f32 %v504, %v114
  %v581 = vmul.f32 %v506, %v115
  %v582 = vmul.f32 %v509, %v116
  %v583 = vmul.f32 %v511, %v117
  %v584 = vmul.f32 %v514, %v118
  %v585 = vmul.f32 %v516, %v119
  %v586 = vmul.f32 %v519, %v120
  %v587 = vmul.f32 %v521, %v121
  %v588 = vpack.c.bf16 %v557, %v556
  %v589 = vpack.c.bf16 %v559, %v558
  %v590 = vpack.c.bf16 %v561, %v560
  %v591 = vpack.c.bf16 %v563, %v562
  %v592 = vpack.c.bf16 %v565, %v564
  %v593 = vpack.c.bf16 %v567, %v566
  %v594 = vpack.c.bf16 %v569, %v568
  %v595 = vpack.c.bf16 %v571, %v570
  %v596 = vpack.c.bf16 %v573, %v572
  %v597 = vpack.c.bf16 %v575, %v574
  %v598 = vpack.c.bf16 %v577, %v576
  %v599 = vpack.c.bf16 %v579, %v578
  %v600 = vpack.c.bf16 %v581, %v580
  %v601 = vpack.c.bf16 %v583, %v582
  %v602 = vpack.c.bf16 %v585, %v584
  %v603 = vpack.c.bf16 %v587, %v586
  %v604 = vpack.c.bf16 %v394, %v392
  %v605 = vpack.c.bf16 %v399, %v397
  %v606 = vpack.c.bf16 %v404, %v402
  %v607 = vpack.c.bf16 %v409, %v407
  %v608 = vld [vmem:[%s11] sm:$0xff]
  %v609 = vld [vmem:[%s11 + $0x8] sm:$0xff]
  %v610 = vld [vmem:[%s11 + $0x10] sm:$0xff]
  %v611 = vld [vmem:[%s11 + $0x18] sm:$0xff]
  %v612 = vld [vmem:[%s11 + $0x20] sm:$0xff]
  %v613 = vld [vmem:[%s11 + $0x28] sm:$0xff]
  %v614 = vld [vmem:[%s11 + $0x30] sm:$0xff]
  %v615 = vld [vmem:[%s11 + $0x38] sm:$0xff]
  %v616 = vld [vmem:[%s11 + $0x40] sm:$0xff]
  %v617 = vld [vmem:[%s11 + $0x48] sm:$0xff]
  %v618 = vld [vmem:[%s11 + $0x50] sm:$0xff]
  %v619 = vld [vmem:[%s11 + $0x58] sm:$0xff]
  %v620 = vld [vmem:[%s11 + $0x60] sm:$0xff]
  %v621 = vld [vmem:[%s11 + $0x68] sm:$0xff]
  %v622 = vld [vmem:[%s11 + $0x70] sm:$0xff]
  %v623 = vld [vmem:[%s11 + $0x78] sm:$0xff]
  %v625 = vsel %vm140, %v604, 0
  %v628 = vsel %vm140, %v605, 0
  %v631 = vsel %vm140, %v606, 0
  %v634 = vsel %vm140, %v607, 0
  %636 = vmatpush.bf16.msra.mxu0 0
  %637 = vmatpush.bf16.msra.mxu0 0
  %638 = vmatpush.bf16.msra.mxu0 0
  %639 = vmatpush.bf16.msra.mxu0 0
  %640 = vmatpush.bf16.msra.mxu0 0
  %641 = vmatpush.bf16.msra.mxu0 0
  %642 = vmatpush.bf16.msra.mxu0 %v554
  %643 = vmatpush.bf16.msra.mxu0 %v552
  %644 = vmatmul.bf16.gmra.mxu0 %v625
  %v645 = vpop.f32.mrf.mxu0
  %v646 = vadd.f32 %v608, %v645
  %v647 = vpop.f32.mrf.mxu0
  %v648 = vadd.f32 %v610, %v647
  %649 = vmatmul.bf16.gmra.mxu0 %v628
  %v650 = vpop.f32.mrf.mxu0
  %v651 = vadd.f32 %v612, %v650
  %v652 = vpop.f32.mrf.mxu0
  %v653 = vadd.f32 %v614, %v652
  %654 = vmatmul.bf16.gmra.mxu0 %v631
  %v655 = vpop.f32.mrf.mxu0
  %v656 = vadd.f32 %v616, %v655
  %v657 = vpop.f32.mrf.mxu0
  %v658 = vadd.f32 %v618, %v657
  %659 = vmatmul.bf16.gmra.mxu0 %v634
  %v660 = vpop.f32.mrf.mxu0
  %v661 = vadd.f32 %v620, %v660
  %v662 = vpop.f32.mrf.mxu0
  %v663 = vadd.f32 %v622, %v662
  %664 = vdwg.mxu0
  %665 = vmatpush.bf16.msra.mxu0 0
  %666 = vmatpush.bf16.msra.mxu0 0
  %667 = vmatpush.bf16.msra.mxu0 0
  %668 = vmatpush.bf16.msra.mxu0 0
  %669 = vmatpush.bf16.msra.mxu0 0
  %670 = vmatpush.bf16.msra.mxu0 0
  %671 = vmatpush.bf16.msra.mxu0 %v555
  %672 = vmatpush.bf16.msra.mxu0 %v553
  %673 = vmatmul.bf16.gmra.mxu0 %v625
  %v674 = vpop.f32.mrf.mxu0
  %v675 = vadd.f32 %v609, %v674
  %v676 = vpop.f32.mrf.mxu0
  %v677 = vadd.f32 %v611, %v676
  %678 = vmatmul.bf16.gmra.mxu0 %v628
  %v679 = vpop.f32.mrf.mxu0
  %v680 = vadd.f32 %v613, %v679
  %v681 = vpop.f32.mrf.mxu0
  %v682 = vadd.f32 %v615, %v681
  %683 = vmatmul.bf16.gmra.mxu0 %v631
  %v684 = vpop.f32.mrf.mxu0
  %v685 = vadd.f32 %v617, %v684
  %v686 = vpop.f32.mrf.mxu0
  %v687 = vadd.f32 %v619, %v686
  %688 = vmatmul.bf16.gmra.mxu0 %v634
  %v689 = vpop.f32.mrf.mxu0
  %v690 = vadd.f32 %v621, %v689
  %v691 = vpop.f32.mrf.mxu0
  %v692 = vadd.f32 %v623, %v691
  %693 = vdwg.mxu0
  %v694 = vmax.f32 %v646, %v675
  %695 = vmax.xlane.f32.xlu0 %v694
  %v696 = vpop.xlane.xlu0 %695
  %v697 = vmax.f32 %v648, %v677
  %698 = vmax.xlane.f32.xlu0 %v697
  %v699 = vpop.xlane.xlu0 %698
  %v700 = vmax.f32 %v651, %v680
  %701 = vmax.xlane.f32.xlu0 %v700
  %v702 = vpop.xlane.xlu0 %701
  %v703 = vmax.f32 %v653, %v682
  %704 = vmax.xlane.f32.xlu0 %v703
  %v705 = vpop.xlane.xlu0 %704
  %v706 = vmax.f32 %v656, %v685
  %707 = vmax.xlane.f32.xlu0 %v706
  %v708 = vpop.xlane.xlu0 %707
  %v709 = vmax.f32 %v658, %v687
  %710 = vmax.xlane.f32.xlu0 %v709
  %v711 = vpop.xlane.xlu0 %710
  %v712 = vmax.f32 %v661, %v690
  %713 = vmax.xlane.f32.xlu0 %v712
  %v714 = vpop.xlane.xlu0 %713
  %v715 = vmax.f32 %v663, %v692
  %716 = vmax.xlane.f32.xlu0 %v715
  %v717 = vpop.xlane.xlu0 %716
  %v718 = vsub.f32 %v646, %v696
  %v719 = vsub.f32 %v675, %v696
  %v720 = vsub.f32 %v648, %v699
  %v721 = vsub.f32 %v677, %v699
  %v722 = vsub.f32 %v651, %v702
  %v723 = vsub.f32 %v680, %v702
  %v724 = vsub.f32 %v653, %v705
  %v725 = vsub.f32 %v682, %v705
  %v726 = vsub.f32 %v656, %v708
  %v727 = vsub.f32 %v685, %v708
  %v728 = vsub.f32 %v658, %v711
  %v729 = vsub.f32 %v687, %v711
  %v730 = vsub.f32 %v661, %v714
  %v731 = vsub.f32 %v690, %v714
  %v732 = vsub.f32 %v663, %v717
  %v733 = vsub.f32 %v692, %v717
  %v734 = vmul.f32 %v718, 1.442695
  %v735 = vpow.pop %v734
  %v736 = vmul.f32 %v719, 1.442695
  %v737 = vpow.pop %v736
  %v738 = vmul.f32 %v720, 1.442695
  %v739 = vpow.pop %v738
  %v740 = vmul.f32 %v721, 1.442695
  %v741 = vpow.pop %v740
  %v742 = vmul.f32 %v722, 1.442695
  %v743 = vpow.pop %v742
  %v744 = vmul.f32 %v723, 1.442695
  %v745 = vpow.pop %v744
  %v746 = vmul.f32 %v724, 1.442695
  %v747 = vpow.pop %v746
  %v748 = vmul.f32 %v725, 1.442695
  %v749 = vpow.pop %v748
  %v750 = vmul.f32 %v726, 1.442695
  %v751 = vpow.pop %v750
  %v752 = vmul.f32 %v727, 1.442695
  %v753 = vpow.pop %v752
  %v754 = vmul.f32 %v728, 1.442695
  %v755 = vpow.pop %v754
  %v756 = vmul.f32 %v729, 1.442695
  %v757 = vpow.pop %v756
  %v758 = vmul.f32 %v730, 1.442695
  %v759 = vpow.pop %v758
  %v760 = vmul.f32 %v731, 1.442695
  %v761 = vpow.pop %v760
  %v762 = vmul.f32 %v732, 1.442695
  %v763 = vpow.pop %v762
  %v764 = vmul.f32 %v733, 1.442695
  %v765 = vpow.pop %v764
  %v766 = vpack.c.bf16 %v739, %v735
  %v767 = vpack.c.bf16 %v741, %v737
  %v768 = vpack.c.bf16 %v747, %v743
  %v769 = vpack.c.bf16 %v749, %v745
  %v770 = vpack.c.bf16 %v755, %v751
  %v771 = vpack.c.bf16 %v757, %v753
  %v772 = vpack.c.bf16 %v763, %v759
  %v773 = vpack.c.bf16 %v765, %v761
  %774 = vmatpush.bf16.msra.mxu0 %v595
  %775 = vmatpush.bf16.msra.mxu0 %v594
  %776 = vmatpush.bf16.msra.mxu0 %v593
  %777 = vmatpush.bf16.msra.mxu0 %v592
  %778 = vmatpush.bf16.msra.mxu0 %v591
  %779 = vmatpush.bf16.msra.mxu0 %v590
  %780 = vmatpush.bf16.msra.mxu0 %v589
  %781 = vmatpush.bf16.msra.mxu0 %v588
  %782 = vmatmul.bf16.gmra.mxu0 %v766
  %v783 = vpop.f32.mrf.mxu0
  %v784 = vadd.f32 0.0, %v783
  %v785 = vpop.f32.mrf.mxu0
  %v786 = vadd.f32 0.0, %v785
  %787 = vmatmul.bf16.gmra.mxu0 %v768
  %v788 = vpop.f32.mrf.mxu0
  %v789 = vadd.f32 0.0, %v788
  %v790 = vpop.f32.mrf.mxu0
  %v791 = vadd.f32 0.0, %v790
  %792 = vmatmul.bf16.gmra.mxu0 %v770
  %v793 = vpop.f32.mrf.mxu0
  %v794 = vadd.f32 0.0, %v793
  %v795 = vpop.f32.mrf.mxu0
  %v796 = vadd.f32 0.0, %v795
  %797 = vmatmul.bf16.gmra.mxu0 %v772
  %v798 = vpop.f32.mrf.mxu0
  %v799 = vadd.f32 0.0, %v798
  %v800 = vpop.f32.mrf.mxu0
  %v801 = vadd.f32 0.0, %v800
  %802 = vdwg.mxu0
  %803 = vmatpush.bf16.msra.mxu0 %v603
  %804 = vmatpush.bf16.msra.mxu0 %v602
  %805 = vmatpush.bf16.msra.mxu0 %v601
  %806 = vmatpush.bf16.msra.mxu0 %v600
  %807 = vmatpush.bf16.msra.mxu0 %v599
  %808 = vmatpush.bf16.msra.mxu0 %v598
  %809 = vmatpush.bf16.msra.mxu0 %v597
  %810 = vmatpush.bf16.msra.mxu0 %v596
  %811 = vmatmul.bf16.gmra.mxu0 %v767
  %v812 = vpop.f32.mrf.mxu0
  %v813 = vadd.f32 %v784, %v812
  %v814 = vpop.f32.mrf.mxu0
  %v815 = vadd.f32 %v786, %v814
  %816 = vmatmul.bf16.gmra.mxu0 %v769
  %v817 = vpop.f32.mrf.mxu0
  %v818 = vadd.f32 %v789, %v817
  %v819 = vpop.f32.mrf.mxu0
  %v820 = vadd.f32 %v791, %v819
  %821 = vmatmul.bf16.gmra.mxu0 %v771
  %v822 = vpop.f32.mrf.mxu0
  %v823 = vadd.f32 %v794, %v822
  %v824 = vpop.f32.mrf.mxu0
  %v825 = vadd.f32 %v796, %v824
  %826 = vmatmul.bf16.gmra.mxu0 %v773
  %v827 = vpop.f32.mrf.mxu0
  %v828 = vadd.f32 %v799, %v827
  %v829 = vpop.f32.mrf.mxu0
  %v830 = vadd.f32 %v801, %v829
  %831 = vdwg.mxu0
  %832 = vmatpush.bf16.msra.mxu0 %v129
  %833 = vmatpush.bf16.msra.mxu0 %v128
  %834 = vmatpush.bf16.msra.mxu0 %v127
  %835 = vmatpush.bf16.msra.mxu0 %v126
  %836 = vmatpush.bf16.msra.mxu0 %v125
  %837 = vmatpush.bf16.msra.mxu0 %v124
  %838 = vmatpush.bf16.msra.mxu0 %v123
  %839 = vmatpush.bf16.msra.mxu0 %v122
  %840 = vmatmul.bf16.gmra.mxu0 %v766
  %v841 = vpop.f32.mrf.mxu0
  %v842 = vadd.f32 0.0, %v841
  %v843 = vpop.f32.mrf.mxu0
  %v844 = vadd.f32 0.0, %v843
  %845 = vmatmul.bf16.gmra.mxu0 %v768
  %v846 = vpop.f32.mrf.mxu0
  %v847 = vadd.f32 0.0, %v846
  %v848 = vpop.f32.mrf.mxu0
  %v849 = vadd.f32 0.0, %v848
  %850 = vmatmul.bf16.gmra.mxu0 %v770
  %v851 = vpop.f32.mrf.mxu0
  %v852 = vadd.f32 0.0, %v851
  %v853 = vpop.f32.mrf.mxu0
  %v854 = vadd.f32 0.0, %v853
  %855 = vmatmul.bf16.gmra.mxu0 %v772
  %v856 = vpop.f32.mrf.mxu0
  %v857 = vadd.f32 0.0, %v856
  %v858 = vpop.f32.mrf.mxu0
  %v859 = vadd.f32 0.0, %v858
  %860 = vdwg.mxu0
  %861 = vmatpush.bf16.msra.mxu0 %v137
  %862 = vmatpush.bf16.msra.mxu0 %v136
  %863 = vmatpush.bf16.msra.mxu0 %v135
  %864 = vmatpush.bf16.msra.mxu0 %v134
  %865 = vmatpush.bf16.msra.mxu0 %v133
  %866 = vmatpush.bf16.msra.mxu0 %v132
  %867 = vmatpush.bf16.msra.mxu0 %v131
  %868 = vmatpush.bf16.msra.mxu0 %v130
  %869 = vmatmul.bf16.gmra.mxu0 %v767
  %v870 = vpop.f32.mrf.mxu0
  %v871 = vadd.f32 %v842, %v870
  %v872 = vpop.f32.mrf.mxu0
  %v873 = vadd.f32 %v844, %v872
  %874 = vmatmul.bf16.gmra.mxu0 %v769
  %v875 = vpop.f32.mrf.mxu0
  %v876 = vadd.f32 %v847, %v875
  %v877 = vpop.f32.mrf.mxu0
  %v878 = vadd.f32 %v849, %v877
  %879 = vmatmul.bf16.gmra.mxu0 %v771
  %v880 = vpop.f32.mrf.mxu0
  %v881 = vadd.f32 %v852, %v880
  %v882 = vpop.f32.mrf.mxu0
  %v883 = vadd.f32 %v854, %v882
  %884 = vmatmul.bf16.gmra.mxu0 %v773
  %v885 = vpop.f32.mrf.mxu0
  %v886 = vadd.f32 %v857, %v885
  %v887 = vpop.f32.mrf.mxu0
  %v888 = vadd.f32 %v859, %v887
  %889 = vdwg.mxu0
  %v890 = vrcp.pop %v871
  %v891 = vrcp.pop %v873
  %v892 = vrcp.pop %v876
  %v893 = vrcp.pop %v878
  %v894 = vrcp.pop %v881
  %v895 = vrcp.pop %v883
  %v896 = vrcp.pop %v886
  %v897 = vrcp.pop %v888
  %v898 = vmul.f32 %v813, %v890
  %v899 = vmul.f32 %v815, %v891
  %v900 = vmul.f32 %v818, %v892
  %v901 = vmul.f32 %v820, %v893
  %v902 = vmul.f32 %v823, %v894
  %v903 = vmul.f32 %v825, %v895
  %v904 = vmul.f32 %v828, %v896
  %v905 = vmul.f32 %v830, %v897
  %v906 = vpack.c.bf16 %v899, %v898
  %v907 = vpack.c.bf16 %v901, %v900
  %v908 = vpack.c.bf16 %v903, %v902
  %v909 = vpack.c.bf16 %v905, %v904
  %v910 = vld [vmem:[%s9] sm:$0xf]
  %v911 = vld [vmem:[%s9 + $0x4] sm:$0xf]
  %v912 = vld [vmem:[%s9 + $0x8] sm:$0xf]
  %v913 = vld [vmem:[%s9 + $0xc] sm:$0xf]
  %v918 = vunpack.c.l.b16 %v910
  %v919 = vunpack.c.l.b16 %v911
  %v920 = vunpack.c.l.b16 %v912
  %v921 = vunpack.c.l.b16 %v913
  %v922 = vpack.c.b16 %v919, %v918
  %v923 = vpack.c.b16 %v921, %v920
  %v927 = vsel %vm140, %v906, 0
  %v930 = vsel %vm140, %v907, 0
  %v933 = vsel %vm140, %v908, 0
  %v936 = vsel %vm140, %v909, 0
  %938 = vmatpush.bf16.msra.mxu0 0
  %939 = vmatpush.bf16.msra.mxu0 0
  %940 = vmatpush.bf16.msra.mxu0 0
  %941 = vmatpush.bf16.msra.mxu0 0
  %942 = vmatpush.bf16.msra.mxu0 0
  %943 = vmatpush.bf16.msra.mxu0 0
  %944 = vmatpush.bf16.msra.mxu0 %v923
  %945 = vmatpush.bf16.msra.mxu0 %v922
  %946 = vmatmul.bf16.gmra.mxu0 %v927
  %v947 = vpop.f32.mrf.mxu0
  %v948 = vadd.f32 0.0, %v947
  %v949 = vpop.f32.mrf.mxu0
  %v950 = vadd.f32 0.0, %v949
  %951 = vmatmul.bf16.gmra.mxu0 %v930
  %v952 = vpop.f32.mrf.mxu0
  %v953 = vadd.f32 0.0, %v952
  %v954 = vpop.f32.mrf.mxu0
  %v955 = vadd.f32 0.0, %v954
  %956 = vmatmul.bf16.gmra.mxu0 %v933
  %v957 = vpop.f32.mrf.mxu0
  %v958 = vadd.f32 0.0, %v957
  %v959 = vpop.f32.mrf.mxu0
  %v960 = vadd.f32 0.0, %v959
  %961 = vmatmul.bf16.gmra.mxu0 %v936
  %v962 = vpop.f32.mrf.mxu0
  %v963 = vadd.f32 0.0, %v962
  %v964 = vpop.f32.mrf.mxu0
  %v965 = vadd.f32 0.0, %v964
  %966 = vdwg.mxu0
  %v967 = vsel %vm140, %v74, 0.0
  %968 = vadd.xlane.f32.xlu0 %v967
  %v969 = vpop.xlane.xlu0 %968
  %v970 = vsel %vm140, %v75, 0.0
  %971 = vadd.xlane.f32.xlu0 %v970
  %v972 = vpop.xlane.xlu0 %971
  %v973 = vsel %vm140, %v76, 0.0
  %974 = vadd.xlane.f32.xlu0 %v973
  %v975 = vpop.xlane.xlu0 %974
  %v976 = vsel %vm140, %v77, 0.0
  %977 = vadd.xlane.f32.xlu0 %v976
  %v978 = vpop.xlane.xlu0 %977
  %v979 = vsel %vm140, %v78, 0.0
  %980 = vadd.xlane.f32.xlu0 %v979
  %v981 = vpop.xlane.xlu0 %980
  %v982 = vsel %vm140, %v79, 0.0
  %983 = vadd.xlane.f32.xlu0 %v982
  %v984 = vpop.xlane.xlu0 %983
  %v985 = vsel %vm140, %v80, 0.0
  %986 = vadd.xlane.f32.xlu0 %v985
  %v987 = vpop.xlane.xlu0 %986
  %v988 = vsel %vm140, %v81, 0.0
  %989 = vadd.xlane.f32.xlu0 %v988
  %v990 = vpop.xlane.xlu0 %989
  %v991 = vmul.f32 %v969, %v171
  %v992 = vmul.f32 %v972, %v171
  %v993 = vmul.f32 %v975, %v171
  %v994 = vmul.f32 %v978, %v171
  %v995 = vmul.f32 %v981, %v171
  %v996 = vmul.f32 %v984, %v171
  %v997 = vmul.f32 %v987, %v171
  %v998 = vmul.f32 %v990, %v171
  %v999 = vsub.f32 %v74, %v991
  %v1000 = vsub.f32 %v75, %v992
  %v1001 = vsub.f32 %v76, %v993
  %v1002 = vsub.f32 %v77, %v994
  %v1003 = vsub.f32 %v78, %v995
  %v1004 = vsub.f32 %v79, %v996
  %v1005 = vsub.f32 %v80, %v997
  %v1006 = vsub.f32 %v81, %v998
  %v1007 = vmul.f32 %v999, %v999
  %v1008 = vmul.f32 %v1000, %v1000
  %v1009 = vmul.f32 %v1001, %v1001
  %v1010 = vmul.f32 %v1002, %v1002
  %v1011 = vmul.f32 %v1003, %v1003
  %v1012 = vmul.f32 %v1004, %v1004
  %v1013 = vmul.f32 %v1005, %v1005
  %v1014 = vmul.f32 %v1006, %v1006
  %v1015 = vsel %vm140, %v1007, 0.0
  %1016 = vadd.xlane.f32.xlu0 %v1015
  %v1017 = vpop.xlane.xlu0 %1016
  %v1018 = vsel %vm140, %v1008, 0.0
  %1019 = vadd.xlane.f32.xlu0 %v1018
  %v1020 = vpop.xlane.xlu0 %1019
  %v1021 = vsel %vm140, %v1009, 0.0
  %1022 = vadd.xlane.f32.xlu0 %v1021
  %v1023 = vpop.xlane.xlu0 %1022
  %v1024 = vsel %vm140, %v1010, 0.0
  %1025 = vadd.xlane.f32.xlu0 %v1024
  %v1026 = vpop.xlane.xlu0 %1025
  %v1027 = vsel %vm140, %v1011, 0.0
  %1028 = vadd.xlane.f32.xlu0 %v1027
  %v1029 = vpop.xlane.xlu0 %1028
  %v1030 = vsel %vm140, %v1012, 0.0
  %1031 = vadd.xlane.f32.xlu0 %v1030
  %v1032 = vpop.xlane.xlu0 %1031
  %v1033 = vsel %vm140, %v1013, 0.0
  %1034 = vadd.xlane.f32.xlu0 %v1033
  %v1035 = vpop.xlane.xlu0 %1034
  %v1036 = vsel %vm140, %v1014, 0.0
  %1037 = vadd.xlane.f32.xlu0 %v1036
  %v1038 = vpop.xlane.xlu0 %1037
  %v1039 = vmul.f32 %v1017, %v171
  %v1040 = vmul.f32 %v1020, %v171
  %v1041 = vmul.f32 %v1023, %v171
  %v1042 = vmul.f32 %v1026, %v171
  %v1043 = vmul.f32 %v1029, %v171
  %v1044 = vmul.f32 %v1032, %v171
  %v1045 = vmul.f32 %v1035, %v171
  %v1046 = vmul.f32 %v1038, %v171
  %v1047 = vadd.f32 %v1039, 1e-05
  %v1048 = vadd.f32 %v1040, 1e-05
  %v1049 = vadd.f32 %v1041, 1e-05
  %v1050 = vadd.f32 %v1042, 1e-05
  %v1051 = vadd.f32 %v1043, 1e-05
  %v1052 = vadd.f32 %v1044, 1e-05
  %v1053 = vadd.f32 %v1045, 1e-05
  %v1054 = vadd.f32 %v1046, 1e-05
  %v1055 = vrsqrt.pop %v1047
  %v1056 = vmul.f32 %v1055, %v1047
  %v1057 = vmul.f32 %v1056, %v1055
  %v1058 = vmul.f32 0.5, %v1057
  %v1059 = vsub.f32 1.5, %v1058
  %v1060 = vmul.f32 %v1055, %v1059
  %vm1061 = vweird.f32 %v1047
  %vm1062 = vweird.f32 %v1055
  %vm1063 = vmor %vm1061, %vm1062
  %v1064 = vsel %vm1063, %v1055, %v1060
  %v1065 = vrsqrt.pop %v1048
  %v1066 = vmul.f32 %v1065, %v1048
  %v1067 = vmul.f32 %v1066, %v1065
  %v1068 = vmul.f32 0.5, %v1067
  %v1069 = vsub.f32 1.5, %v1068
  %v1070 = vmul.f32 %v1065, %v1069
  %vm1071 = vweird.f32 %v1048
  %vm1072 = vweird.f32 %v1065
  %vm1073 = vmor %vm1071, %vm1072
  %v1074 = vsel %vm1073, %v1065, %v1070
  %v1075 = vrsqrt.pop %v1049
  %v1076 = vmul.f32 %v1075, %v1049
  %v1077 = vmul.f32 %v1076, %v1075
  %v1078 = vmul.f32 0.5, %v1077
  %v1079 = vsub.f32 1.5, %v1078
  %v1080 = vmul.f32 %v1075, %v1079
  %vm1081 = vweird.f32 %v1049
  %vm1082 = vweird.f32 %v1075
  %vm1083 = vmor %vm1081, %vm1082
  %v1084 = vsel %vm1083, %v1075, %v1080
  %v1085 = vrsqrt.pop %v1050
  %v1086 = vmul.f32 %v1085, %v1050
  %v1087 = vmul.f32 %v1086, %v1085
  %v1088 = vmul.f32 0.5, %v1087
  %v1089 = vsub.f32 1.5, %v1088
  %v1090 = vmul.f32 %v1085, %v1089
  %vm1091 = vweird.f32 %v1050
  %vm1092 = vweird.f32 %v1085
  %vm1093 = vmor %vm1091, %vm1092
  %v1094 = vsel %vm1093, %v1085, %v1090
  %v1095 = vrsqrt.pop %v1051
  %v1096 = vmul.f32 %v1095, %v1051
  %v1097 = vmul.f32 %v1096, %v1095
  %v1098 = vmul.f32 0.5, %v1097
  %v1099 = vsub.f32 1.5, %v1098
  %v1100 = vmul.f32 %v1095, %v1099
  %vm1101 = vweird.f32 %v1051
  %vm1102 = vweird.f32 %v1095
  %vm1103 = vmor %vm1101, %vm1102
  %v1104 = vsel %vm1103, %v1095, %v1100
  %v1105 = vrsqrt.pop %v1052
  %v1106 = vmul.f32 %v1105, %v1052
  %v1107 = vmul.f32 %v1106, %v1105
  %v1108 = vmul.f32 0.5, %v1107
  %v1109 = vsub.f32 1.5, %v1108
  %v1110 = vmul.f32 %v1105, %v1109
  %vm1111 = vweird.f32 %v1052
  %vm1112 = vweird.f32 %v1105
  %vm1113 = vmor %vm1111, %vm1112
  %v1114 = vsel %vm1113, %v1105, %v1110
  %v1115 = vrsqrt.pop %v1053
  %v1116 = vmul.f32 %v1115, %v1053
  %v1117 = vmul.f32 %v1116, %v1115
  %v1118 = vmul.f32 0.5, %v1117
  %v1119 = vsub.f32 1.5, %v1118
  %v1120 = vmul.f32 %v1115, %v1119
  %vm1121 = vweird.f32 %v1053
  %vm1122 = vweird.f32 %v1115
  %vm1123 = vmor %vm1121, %vm1122
  %v1124 = vsel %vm1123, %v1115, %v1120
  %v1125 = vrsqrt.pop %v1054
  %v1126 = vmul.f32 %v1125, %v1054
  %v1127 = vmul.f32 %v1126, %v1125
  %v1128 = vmul.f32 0.5, %v1127
  %v1129 = vsub.f32 1.5, %v1128
  %v1130 = vmul.f32 %v1125, %v1129
  %vm1131 = vweird.f32 %v1054
  %vm1132 = vweird.f32 %v1125
  %vm1133 = vmor %vm1131, %vm1132
  %v1134 = vsel %vm1133, %v1125, %v1130
  %v1135 = vmul.f32 %v999, %v1064
  %v1136 = vmul.f32 %v1000, %v1074
  %v1137 = vmul.f32 %v1001, %v1084
  %v1138 = vmul.f32 %v1002, %v1094
  %v1139 = vmul.f32 %v1003, %v1104
  %v1140 = vmul.f32 %v1004, %v1114
  %v1141 = vmul.f32 %v1005, %v1124
  %v1142 = vmul.f32 %v1006, %v1134
  %v1143 = vmul.f32 %v1135, %v325
  %v1144 = vmul.f32 %v1136, %v325
  %v1145 = vmul.f32 %v1137, %v325
  %v1146 = vmul.f32 %v1138, %v325
  %v1147 = vmul.f32 %v1139, %v325
  %v1148 = vmul.f32 %v1140, %v325
  %v1149 = vmul.f32 %v1141, %v325
  %v1150 = vmul.f32 %v1142, %v325
  %v1151 = vadd.f32 %v1143, %v336
  %v1152 = vadd.f32 %v1144, %v336
  %v1153 = vadd.f32 %v1145, %v336
  %v1154 = vadd.f32 %v1146, %v336
  %v1155 = vadd.f32 %v1147, %v336
  %v1156 = vadd.f32 %v1148, %v336
  %v1157 = vadd.f32 %v1149, %v336
  %v1158 = vadd.f32 %v1150, %v336
  %v1159 = vpack.c.bf16 %v1152, %v1151
  %v1160 = vpack.c.bf16 %v1154, %v1153
  %v1161 = vpack.c.bf16 %v1156, %v1155
  %v1162 = vpack.c.bf16 %v1158, %v1157
  %v1164 = vsel %vm140, %v1159, 0
  %v1167 = vsel %vm140, %v1160, 0
  %v1170 = vsel %vm140, %v1161, 0
  %v1173 = vsel %vm140, %v1162, 0
  %1175 = vmatpush.bf16.msra.mxu0 0
  %1176 = vmatpush.bf16.msra.mxu0 0
  %1177 = vmatpush.bf16.msra.mxu0 0
  %1178 = vmatpush.bf16.msra.mxu0 0
  %1179 = vmatpush.bf16.msra.mxu0 0
  %1180 = vmatpush.bf16.msra.mxu0 0
  %1181 = vmatpush.bf16.msra.mxu0 %v367
  %1182 = vmatpush.bf16.msra.mxu0 %v366
  %1183 = vmatmul.bf16.gmra.mxu0 %v1164
  %v1184 = vpop.f32.mrf.mxu0
  %v1185 = vadd.f32 %v356, %v1184
  %v1186 = vpop.f32.mrf.mxu0
  %v1187 = vadd.f32 %v356, %v1186
  %1188 = vmatmul.bf16.gmra.mxu0 %v1167
  %v1189 = vpop.f32.mrf.mxu0
  %v1190 = vadd.f32 %v356, %v1189
  %v1191 = vpop.f32.mrf.mxu0
  %v1192 = vadd.f32 %v356, %v1191
  %1193 = vmatmul.bf16.gmra.mxu0 %v1170
  %v1194 = vpop.f32.mrf.mxu0
  %v1195 = vadd.f32 %v356, %v1194
  %v1196 = vpop.f32.mrf.mxu0
  %v1197 = vadd.f32 %v356, %v1196
  %1198 = vmatmul.bf16.gmra.mxu0 %v1173
  %v1199 = vpop.f32.mrf.mxu0
  %v1200 = vadd.f32 %v356, %v1199
  %v1201 = vpop.f32.mrf.mxu0
  %v1202 = vadd.f32 %v356, %v1201
  %1203 = vdwg.mxu0
  %1204 = vmatpush.bf16.xpose.msra.mxu0 0
  %1205 = vmatpush.bf16.xpose.msra.mxu0 0
  %1206 = vmatpush.bf16.xpose.msra.mxu0 0
  %1207 = vmatpush.bf16.xpose.msra.mxu0 0
  %1208 = vmatpush.bf16.xpose.msra.mxu0 %v1173
  %1209 = vmatpush.bf16.xpose.msra.mxu0 %v1170
  %1210 = vmatpush.bf16.xpose.msra.mxu0 %v1167
  %1211 = vmatpush.bf16.xpose.msra.mxu0 %v1164
  %1212 = vmatmul.bf16.gmra.mxu0 %v450
  %v1213 = vpop.f32.mrf.mxu0
  %v1214 = vadd.f32 %v422, %v1213
  %v1215 = vpop.f32.mrf.mxu0
  %v1216 = vadd.f32 %v427, %v1215
  %1217 = vmatmul.bf16.gmra.mxu0 %v453
  %v1218 = vpop.f32.mrf.mxu0
  %v1219 = vadd.f32 %v432, %v1218
  %v1220 = vpop.f32.mrf.mxu0
  %v1221 = vadd.f32 %v437, %v1220
  %1222 = vdwg.mxu0
  %1223 = vmatpush.bf16.msra.mxu0 0
  %1224 = vmatpush.bf16.msra.mxu0 0
  %1225 = vmatpush.bf16.msra.mxu0 0
  %1226 = vmatpush.bf16.msra.mxu0 0
  %1227 = vmatpush.bf16.msra.mxu0 0
  %1228 = vmatpush.bf16.msra.mxu0 0
  %1229 = vmatpush.bf16.msra.mxu0 %v491
  %1230 = vmatpush.bf16.msra.mxu0 %v490
  %1231 = vmatmul.bf16.gmra.mxu0 %v1164
  %v1232 = vpop.f32.mrf.mxu0
  %v1233 = vadd.f32 %v480, %v1232
  %v1234 = vpop.f32.mrf.mxu0
  %v1235 = vadd.f32 %v480, %v1234
  %1236 = vmatmul.bf16.gmra.mxu0 %v1167
  %v1237 = vpop.f32.mrf.mxu0
  %v1238 = vadd.f32 %v480, %v1237
  %v1239 = vpop.f32.mrf.mxu0
  %v1240 = vadd.f32 %v480, %v1239
  %1241 = vmatmul.bf16.gmra.mxu0 %v1170
  %v1242 = vpop.f32.mrf.mxu0
  %v1243 = vadd.f32 %v480, %v1242
  %v1244 = vpop.f32.mrf.mxu0
  %v1245 = vadd.f32 %v480, %v1244
  %1246 = vmatmul.bf16.gmra.mxu0 %v1173
  %v1247 = vpop.f32.mrf.mxu0
  %v1248 = vadd.f32 %v480, %v1247
  %v1249 = vpop.f32.mrf.mxu0
  %v1250 = vadd.f32 %v480, %v1249
  %1251 = vdwg.mxu0
  %1256 = vrot.lane.b32.xlu0 %v1214, 64
  %v1257 = vpop.permute.xlu0 %1256
  %1258 = vrot.lane.b32.xlu0 %v1216, 64
  %v1259 = vpop.permute.xlu0 %1258
  %1260 = vrot.lane.b32.xlu0 %v1219, 64
  %v1261 = vpop.permute.xlu0 %1260
  %1262 = vrot.lane.b32.xlu0 %v1221, 64
  %v1263 = vpop.permute.xlu0 %1262
  %v1268 = vsel %vm539, %v1214, %v1257
  %v1269 = vsel %vm539, %v1216, %v1259
  %v1270 = vsel %vm539, %v1219, %v1261
  %v1271 = vsel %vm539, %v1221, %v1263
  %v1272 = vmul.f32 %v1268, %v82
  %v1273 = vmul.f32 %v1268, %v83
  %v1274 = vmul.f32 %v1269, %v84
  %v1275 = vmul.f32 %v1269, %v85
  %v1276 = vmul.f32 %v1270, %v86
  %v1277 = vmul.f32 %v1270, %v87
  %v1278 = vmul.f32 %v1271, %v88
  %v1279 = vmul.f32 %v1271, %v89
  %v1280 = vpack.c.bf16 %v1274, %v1272
  %v1281 = vpack.c.bf16 %v1275, %v1273
  %v1282 = vpack.c.bf16 %v1278, %v1276
  %v1283 = vpack.c.bf16 %v1279, %v1277
  %v1284 = vmul.f32 %v1233, %v90
  %v1285 = vmul.f32 %v1235, %v91
  %v1286 = vmul.f32 %v1238, %v92
  %v1287 = vmul.f32 %v1240, %v93
  %v1288 = vmul.f32 %v1243, %v94
  %v1289 = vmul.f32 %v1245, %v95
  %v1290 = vmul.f32 %v1248, %v96
  %v1291 = vmul.f32 %v1250, %v97
  %v1292 = vmul.f32 %v1233, %v98
  %v1293 = vmul.f32 %v1235, %v99
  %v1294 = vmul.f32 %v1238, %v100
  %v1295 = vmul.f32 %v1240, %v101
  %v1296 = vmul.f32 %v1243, %v102
  %v1297 = vmul.f32 %v1245, %v103
  %v1298 = vmul.f32 %v1248, %v104
  %v1299 = vmul.f32 %v1250, %v105
  %v1300 = vmul.f32 %v1233, %v106
  %v1301 = vmul.f32 %v1235, %v107
  %v1302 = vmul.f32 %v1238, %v108
  %v1303 = vmul.f32 %v1240, %v109
  %v1304 = vmul.f32 %v1243, %v110
  %v1305 = vmul.f32 %v1245, %v111
  %v1306 = vmul.f32 %v1248, %v112
  %v1307 = vmul.f32 %v1250, %v113
  %v1308 = vmul.f32 %v1233, %v114
  %v1309 = vmul.f32 %v1235, %v115
  %v1310 = vmul.f32 %v1238, %v116
  %v1311 = vmul.f32 %v1240, %v117
  %v1312 = vmul.f32 %v1243, %v118
  %v1313 = vmul.f32 %v1245, %v119
  %v1314 = vmul.f32 %v1248, %v120
  %v1315 = vmul.f32 %v1250, %v121
  %v1316 = vpack.c.bf16 %v1285, %v1284
  %v1317 = vpack.c.bf16 %v1287, %v1286
  %v1318 = vpack.c.bf16 %v1289, %v1288
  %v1319 = vpack.c.bf16 %v1291, %v1290
  %v1320 = vpack.c.bf16 %v1293, %v1292
  %v1321 = vpack.c.bf16 %v1295, %v1294
  %v1322 = vpack.c.bf16 %v1297, %v1296
  %v1323 = vpack.c.bf16 %v1299, %v1298
  %v1324 = vpack.c.bf16 %v1301, %v1300
  %v1325 = vpack.c.bf16 %v1303, %v1302
  %v1326 = vpack.c.bf16 %v1305, %v1304
  %v1327 = vpack.c.bf16 %v1307, %v1306
  %v1328 = vpack.c.bf16 %v1309, %v1308
  %v1329 = vpack.c.bf16 %v1311, %v1310
  %v1330 = vpack.c.bf16 %v1313, %v1312
  %v1331 = vpack.c.bf16 %v1315, %v1314
  %v1332 = vpack.c.bf16 %v1187, %v1185
  %v1333 = vpack.c.bf16 %v1192, %v1190
  %v1334 = vpack.c.bf16 %v1197, %v1195
  %v1335 = vpack.c.bf16 %v1202, %v1200
  %v1337 = vsel %vm140, %v1332, 0
  %v1340 = vsel %vm140, %v1333, 0
  %v1343 = vsel %vm140, %v1334, 0
  %v1346 = vsel %vm140, %v1335, 0
  %1348 = vmatpush.bf16.msra.mxu0 0
  %1349 = vmatpush.bf16.msra.mxu0 0
  %1350 = vmatpush.bf16.msra.mxu0 0
  %1351 = vmatpush.bf16.msra.mxu0 0
  %1352 = vmatpush.bf16.msra.mxu0 0
  %1353 = vmatpush.bf16.msra.mxu0 0
  %1354 = vmatpush.bf16.msra.mxu0 %v1282
  %1355 = vmatpush.bf16.msra.mxu0 %v1280
  %1356 = vmatmul.bf16.gmra.mxu0 %v1337
  %v1357 = vpop.f32.mrf.mxu0
  %v1358 = vadd.f32 %v608, %v1357
  %v1359 = vpop.f32.mrf.mxu0
  %v1360 = vadd.f32 %v610, %v1359
  %1361 = vmatmul.bf16.gmra.mxu0 %v1340
  %v1362 = vpop.f32.mrf.mxu0
  %v1363 = vadd.f32 %v612, %v1362
  %v1364 = vpop.f32.mrf.mxu0
  %v1365 = vadd.f32 %v614, %v1364
  %1366 = vmatmul.bf16.gmra.mxu0 %v1343
  %v1367 = vpop.f32.mrf.mxu0
  %v1368 = vadd.f32 %v616, %v1367
  %v1369 = vpop.f32.mrf.mxu0
  %v1370 = vadd.f32 %v618, %v1369
  %1371 = vmatmul.bf16.gmra.mxu0 %v1346
  %v1372 = vpop.f32.mrf.mxu0
  %v1373 = vadd.f32 %v620, %v1372
  %v1374 = vpop.f32.mrf.mxu0
  %v1375 = vadd.f32 %v622, %v1374
  %1376 = vdwg.mxu0
  %1377 = vmatpush.bf16.msra.mxu0 0
  %1378 = vmatpush.bf16.msra.mxu0 0
  %1379 = vmatpush.bf16.msra.mxu0 0
  %1380 = vmatpush.bf16.msra.mxu0 0
  %1381 = vmatpush.bf16.msra.mxu0 0
  %1382 = vmatpush.bf16.msra.mxu0 0
  %1383 = vmatpush.bf16.msra.mxu0 %v1283
  %1384 = vmatpush.bf16.msra.mxu0 %v1281
  %1385 = vmatmul.bf16.gmra.mxu0 %v1337
  %v1386 = vpop.f32.mrf.mxu0
  %v1387 = vadd.f32 %v609, %v1386
  %v1388 = vpop.f32.mrf.mxu0
  %v1389 = vadd.f32 %v611, %v1388
  %1390 = vmatmul.bf16.gmra.mxu0 %v1340
  %v1391 = vpop.f32.mrf.mxu0
  %v1392 = vadd.f32 %v613, %v1391
  %v1393 = vpop.f32.mrf.mxu0
  %v1394 = vadd.f32 %v615, %v1393
  %1395 = vmatmul.bf16.gmra.mxu0 %v1343
  %v1396 = vpop.f32.mrf.mxu0
  %v1397 = vadd.f32 %v617, %v1396
  %v1398 = vpop.f32.mrf.mxu0
  %v1399 = vadd.f32 %v619, %v1398
  %1400 = vmatmul.bf16.gmra.mxu0 %v1346
  %v1401 = vpop.f32.mrf.mxu0
  %v1402 = vadd.f32 %v621, %v1401
  %v1403 = vpop.f32.mrf.mxu0
  %v1404 = vadd.f32 %v623, %v1403
  %1405 = vdwg.mxu0
  %v1406 = vmax.f32 %v1358, %v1387
  %1407 = vmax.xlane.f32.xlu0 %v1406
  %v1408 = vpop.xlane.xlu0 %1407
  %v1409 = vmax.f32 %v1360, %v1389
  %1410 = vmax.xlane.f32.xlu0 %v1409
  %v1411 = vpop.xlane.xlu0 %1410
  %v1412 = vmax.f32 %v1363, %v1392
  %1413 = vmax.xlane.f32.xlu0 %v1412
  %v1414 = vpop.xlane.xlu0 %1413
  %v1415 = vmax.f32 %v1365, %v1394
  %1416 = vmax.xlane.f32.xlu0 %v1415
  %v1417 = vpop.xlane.xlu0 %1416
  %v1418 = vmax.f32 %v1368, %v1397
  %1419 = vmax.xlane.f32.xlu0 %v1418
  %v1420 = vpop.xlane.xlu0 %1419
  %v1421 = vmax.f32 %v1370, %v1399
  %1422 = vmax.xlane.f32.xlu0 %v1421
  %v1423 = vpop.xlane.xlu0 %1422
  %v1424 = vmax.f32 %v1373, %v1402
  %1425 = vmax.xlane.f32.xlu0 %v1424
  %v1426 = vpop.xlane.xlu0 %1425
  %v1427 = vmax.f32 %v1375, %v1404
  %1428 = vmax.xlane.f32.xlu0 %v1427
  %v1429 = vpop.xlane.xlu0 %1428
  %v1430 = vsub.f32 %v1358, %v1408
  %v1431 = vsub.f32 %v1387, %v1408
  %v1432 = vsub.f32 %v1360, %v1411
  %v1433 = vsub.f32 %v1389, %v1411
  %v1434 = vsub.f32 %v1363, %v1414
  %v1435 = vsub.f32 %v1392, %v1414
  %v1436 = vsub.f32 %v1365, %v1417
  %v1437 = vsub.f32 %v1394, %v1417
  %v1438 = vsub.f32 %v1368, %v1420
  %v1439 = vsub.f32 %v1397, %v1420
  %v1440 = vsub.f32 %v1370, %v1423
  %v1441 = vsub.f32 %v1399, %v1423
  %v1442 = vsub.f32 %v1373, %v1426
  %v1443 = vsub.f32 %v1402, %v1426
  %v1444 = vsub.f32 %v1375, %v1429
  %v1445 = vsub.f32 %v1404, %v1429
  %v1446 = vmul.f32 %v1430, 1.442695
  %v1447 = vpow.pop %v1446
  %v1448 = vmul.f32 %v1431, 1.442695
  %v1449 = vpow.pop %v1448
  %v1450 = vmul.f32 %v1432, 1.442695
  %v1451 = vpow.pop %v1450
  %v1452 = vmul.f32 %v1433, 1.442695
  %v1453 = vpow.pop %v1452
  %v1454 = vmul.f32 %v1434, 1.442695
  %v1455 = vpow.pop %v1454
  %v1456 = vmul.f32 %v1435, 1.442695
  %v1457 = vpow.pop %v1456
  %v1458 = vmul.f32 %v1436, 1.442695
  %v1459 = vpow.pop %v1458
  %v1460 = vmul.f32 %v1437, 1.442695
  %v1461 = vpow.pop %v1460
  %v1462 = vmul.f32 %v1438, 1.442695
  %v1463 = vpow.pop %v1462
  %v1464 = vmul.f32 %v1439, 1.442695
  %v1465 = vpow.pop %v1464
  %v1466 = vmul.f32 %v1440, 1.442695
  %v1467 = vpow.pop %v1466
  %v1468 = vmul.f32 %v1441, 1.442695
  %v1469 = vpow.pop %v1468
  %v1470 = vmul.f32 %v1442, 1.442695
  %v1471 = vpow.pop %v1470
  %v1472 = vmul.f32 %v1443, 1.442695
  %v1473 = vpow.pop %v1472
  %v1474 = vmul.f32 %v1444, 1.442695
  %v1475 = vpow.pop %v1474
  %v1476 = vmul.f32 %v1445, 1.442695
  %v1477 = vpow.pop %v1476
  %v1478 = vpack.c.bf16 %v1451, %v1447
  %v1479 = vpack.c.bf16 %v1453, %v1449
  %v1480 = vpack.c.bf16 %v1459, %v1455
  %v1481 = vpack.c.bf16 %v1461, %v1457
  %v1482 = vpack.c.bf16 %v1467, %v1463
  %v1483 = vpack.c.bf16 %v1469, %v1465
  %v1484 = vpack.c.bf16 %v1475, %v1471
  %v1485 = vpack.c.bf16 %v1477, %v1473
  %1486 = vmatpush.bf16.msra.mxu0 %v1323
  %1487 = vmatpush.bf16.msra.mxu0 %v1322
  %1488 = vmatpush.bf16.msra.mxu0 %v1321
  %1489 = vmatpush.bf16.msra.mxu0 %v1320
  %1490 = vmatpush.bf16.msra.mxu0 %v1319
  %1491 = vmatpush.bf16.msra.mxu0 %v1318
  %1492 = vmatpush.bf16.msra.mxu0 %v1317
  %1493 = vmatpush.bf16.msra.mxu0 %v1316
  %1494 = vmatmul.bf16.gmra.mxu0 %v1478
  %v1495 = vpop.f32.mrf.mxu0
  %v1496 = vadd.f32 0.0, %v1495
  %v1497 = vpop.f32.mrf.mxu0
  %v1498 = vadd.f32 0.0, %v1497
  %1499 = vmatmul.bf16.gmra.mxu0 %v1480
  %v1500 = vpop.f32.mrf.mxu0
  %v1501 = vadd.f32 0.0, %v1500
  %v1502 = vpop.f32.mrf.mxu0
  %v1503 = vadd.f32 0.0, %v1502
  %1504 = vmatmul.bf16.gmra.mxu0 %v1482
  %v1505 = vpop.f32.mrf.mxu0
  %v1506 = vadd.f32 0.0, %v1505
  %v1507 = vpop.f32.mrf.mxu0
  %v1508 = vadd.f32 0.0, %v1507
  %1509 = vmatmul.bf16.gmra.mxu0 %v1484
  %v1510 = vpop.f32.mrf.mxu0
  %v1511 = vadd.f32 0.0, %v1510
  %v1512 = vpop.f32.mrf.mxu0
  %v1513 = vadd.f32 0.0, %v1512
  %1514 = vdwg.mxu0
  %1515 = vmatpush.bf16.msra.mxu0 %v1331
  %1516 = vmatpush.bf16.msra.mxu0 %v1330
  %1517 = vmatpush.bf16.msra.mxu0 %v1329
  %1518 = vmatpush.bf16.msra.mxu0 %v1328
  %1519 = vmatpush.bf16.msra.mxu0 %v1327
  %1520 = vmatpush.bf16.msra.mxu0 %v1326
  %1521 = vmatpush.bf16.msra.mxu0 %v1325
  %1522 = vmatpush.bf16.msra.mxu0 %v1324
  %1523 = vmatmul.bf16.gmra.mxu0 %v1479
  %v1524 = vpop.f32.mrf.mxu0
  %v1525 = vadd.f32 %v1496, %v1524
  %v1526 = vpop.f32.mrf.mxu0
  %v1527 = vadd.f32 %v1498, %v1526
  %1528 = vmatmul.bf16.gmra.mxu0 %v1481
  %v1529 = vpop.f32.mrf.mxu0
  %v1530 = vadd.f32 %v1501, %v1529
  %v1531 = vpop.f32.mrf.mxu0
  %v1532 = vadd.f32 %v1503, %v1531
  %1533 = vmatmul.bf16.gmra.mxu0 %v1483
  %v1534 = vpop.f32.mrf.mxu0
  %v1535 = vadd.f32 %v1506, %v1534
  %v1536 = vpop.f32.mrf.mxu0
  %v1537 = vadd.f32 %v1508, %v1536
  %1538 = vmatmul.bf16.gmra.mxu0 %v1485
  %v1539 = vpop.f32.mrf.mxu0
  %v1540 = vadd.f32 %v1511, %v1539
  %v1541 = vpop.f32.mrf.mxu0
  %v1542 = vadd.f32 %v1513, %v1541
  %1543 = vdwg.mxu0
  %1544 = vmatpush.bf16.msra.mxu0 %v129
  %1545 = vmatpush.bf16.msra.mxu0 %v128
  %1546 = vmatpush.bf16.msra.mxu0 %v127
  %1547 = vmatpush.bf16.msra.mxu0 %v126
  %1548 = vmatpush.bf16.msra.mxu0 %v125
  %1549 = vmatpush.bf16.msra.mxu0 %v124
  %1550 = vmatpush.bf16.msra.mxu0 %v123
  %1551 = vmatpush.bf16.msra.mxu0 %v122
  %1552 = vmatmul.bf16.gmra.mxu0 %v1478
  %v1553 = vpop.f32.mrf.mxu0
  %v1554 = vadd.f32 0.0, %v1553
  %v1555 = vpop.f32.mrf.mxu0
  %v1556 = vadd.f32 0.0, %v1555
  %1557 = vmatmul.bf16.gmra.mxu0 %v1480
  %v1558 = vpop.f32.mrf.mxu0
  %v1559 = vadd.f32 0.0, %v1558
  %v1560 = vpop.f32.mrf.mxu0
  %v1561 = vadd.f32 0.0, %v1560
  %1562 = vmatmul.bf16.gmra.mxu0 %v1482
  %v1563 = vpop.f32.mrf.mxu0
  %v1564 = vadd.f32 0.0, %v1563
  %v1565 = vpop.f32.mrf.mxu0
  %v1566 = vadd.f32 0.0, %v1565
  %1567 = vmatmul.bf16.gmra.mxu0 %v1484
  %v1568 = vpop.f32.mrf.mxu0
  %v1569 = vadd.f32 0.0, %v1568
  %v1570 = vpop.f32.mrf.mxu0
  %v1571 = vadd.f32 0.0, %v1570
  %1572 = vdwg.mxu0
  %1573 = vmatpush.bf16.msra.mxu0 %v137
  %1574 = vmatpush.bf16.msra.mxu0 %v136
  %1575 = vmatpush.bf16.msra.mxu0 %v135
  %1576 = vmatpush.bf16.msra.mxu0 %v134
  %1577 = vmatpush.bf16.msra.mxu0 %v133
  %1578 = vmatpush.bf16.msra.mxu0 %v132
  %1579 = vmatpush.bf16.msra.mxu0 %v131
  %1580 = vmatpush.bf16.msra.mxu0 %v130
  %1581 = vmatmul.bf16.gmra.mxu0 %v1479
  %v1582 = vpop.f32.mrf.mxu0
  %v1583 = vadd.f32 %v1554, %v1582
  %v1584 = vpop.f32.mrf.mxu0
  %v1585 = vadd.f32 %v1556, %v1584
  %1586 = vmatmul.bf16.gmra.mxu0 %v1481
  %v1587 = vpop.f32.mrf.mxu0
  %v1588 = vadd.f32 %v1559, %v1587
  %v1589 = vpop.f32.mrf.mxu0
  %v1590 = vadd.f32 %v1561, %v1589
  %1591 = vmatmul.bf16.gmra.mxu0 %v1483
  %v1592 = vpop.f32.mrf.mxu0
  %v1593 = vadd.f32 %v1564, %v1592
  %v1594 = vpop.f32.mrf.mxu0
  %v1595 = vadd.f32 %v1566, %v1594
  %1596 = vmatmul.bf16.gmra.mxu0 %v1485
  %v1597 = vpop.f32.mrf.mxu0
  %v1598 = vadd.f32 %v1569, %v1597
  %v1599 = vpop.f32.mrf.mxu0
  %v1600 = vadd.f32 %v1571, %v1599
  %1601 = vdwg.mxu0
  %v1602 = vrcp.pop %v1583
  %v1603 = vrcp.pop %v1585
  %v1604 = vrcp.pop %v1588
  %v1605 = vrcp.pop %v1590
  %v1606 = vrcp.pop %v1593
  %v1607 = vrcp.pop %v1595
  %v1608 = vrcp.pop %v1598
  %v1609 = vrcp.pop %v1600
  %v1610 = vmul.f32 %v1525, %v1602
  %v1611 = vmul.f32 %v1527, %v1603
  %v1612 = vmul.f32 %v1530, %v1604
  %v1613 = vmul.f32 %v1532, %v1605
  %v1614 = vmul.f32 %v1535, %v1606
  %v1615 = vmul.f32 %v1537, %v1607
  %v1616 = vmul.f32 %v1540, %v1608
  %v1617 = vmul.f32 %v1542, %v1609
  %v1618 = vpack.c.bf16 %v1611, %v1610
  %v1619 = vpack.c.bf16 %v1613, %v1612
  %v1620 = vpack.c.bf16 %v1615, %v1614
  %v1621 = vpack.c.bf16 %v1617, %v1616
  %v1623 = vsel %vm140, %v1618, 0
  %v1626 = vsel %vm140, %v1619, 0
  %v1629 = vsel %vm140, %v1620, 0
  %v1632 = vsel %vm140, %v1621, 0
  %1634 = vmatpush.bf16.msra.mxu0 0
  %1635 = vmatpush.bf16.msra.mxu0 0
  %1636 = vmatpush.bf16.msra.mxu0 0
  %1637 = vmatpush.bf16.msra.mxu0 0
  %1638 = vmatpush.bf16.msra.mxu0 0
  %1639 = vmatpush.bf16.msra.mxu0 0
  %1640 = vmatpush.bf16.msra.mxu0 %v923
  %1641 = vmatpush.bf16.msra.mxu0 %v922
  %1642 = vmatmul.bf16.gmra.mxu0 %v1623
  %v1643 = vpop.f32.mrf.mxu0
  %v1644 = vadd.f32 0.0, %v1643
  %v1645 = vpop.f32.mrf.mxu0
  %v1646 = vadd.f32 0.0, %v1645
  %1647 = vmatmul.bf16.gmra.mxu0 %v1626
  %v1648 = vpop.f32.mrf.mxu0
  %v1649 = vadd.f32 0.0, %v1648
  %v1650 = vpop.f32.mrf.mxu0
  %v1651 = vadd.f32 0.0, %v1650
  %1652 = vmatmul.bf16.gmra.mxu0 %v1629
  %v1653 = vpop.f32.mrf.mxu0
  %v1654 = vadd.f32 0.0, %v1653
  %v1655 = vpop.f32.mrf.mxu0
  %v1656 = vadd.f32 0.0, %v1655
  %1657 = vmatmul.bf16.gmra.mxu0 %v1632
  %v1658 = vpop.f32.mrf.mxu0
  %v1659 = vadd.f32 0.0, %v1658
  %v1660 = vpop.f32.mrf.mxu0
  %v1661 = vadd.f32 0.0, %v1660
  %1662 = vdwg.mxu0
  %v1663 = vadd.f32 %v66, %v948
  %v1664 = vadd.f32 %v67, %v950
  %v1665 = vadd.f32 %v68, %v953
  %v1666 = vadd.f32 %v69, %v955
  %v1667 = vadd.f32 %v70, %v958
  %v1668 = vadd.f32 %v71, %v960
  %v1669 = vadd.f32 %v72, %v963
  %v1670 = vadd.f32 %v73, %v965
  %v1671 = vadd.f32 %v74, %v1644
  %v1672 = vadd.f32 %v75, %v1646
  %v1673 = vadd.f32 %v76, %v1649
  %v1674 = vadd.f32 %v77, %v1651
  %v1675 = vadd.f32 %v78, %v1654
  %v1676 = vadd.f32 %v79, %v1656
  %v1677 = vadd.f32 %v80, %v1659
  %v1678 = vadd.f32 %v81, %v1661
  %v1679 = vld [vmem:[%s10] sm:$0x1]
  %v1681 = vperm.slane %v1679, 0
  %v1683 = vadd.f32 %v1663, %v1681
  %v1684 = vadd.f32 %v1664, %v1681
  %v1685 = vadd.f32 %v1665, %v1681
  %v1686 = vadd.f32 %v1666, %v1681
  %v1687 = vadd.f32 %v1667, %v1681
  %v1688 = vadd.f32 %v1668, %v1681
  %v1689 = vadd.f32 %v1669, %v1681
  %v1690 = vadd.f32 %v1670, %v1681
  %v1691 = vadd.f32 %v1671, %v1681
  %v1692 = vadd.f32 %v1672, %v1681
  %v1693 = vadd.f32 %v1673, %v1681
  %v1694 = vadd.f32 %v1674, %v1681
  %v1695 = vadd.f32 %v1675, %v1681
  %v1696 = vadd.f32 %v1676, %v1681
  %v1697 = vadd.f32 %v1677, %v1681
  %v1698 = vadd.f32 %v1678, %v1681
  %v1699 = vld [vmem:[%s14] sm:$0x1]
  %v1700 = vld [vmem:[%s15] sm:$0x1]
  %v1701 = vsel %vm140, %v1683, 0.0
  %1702 = vadd.xlane.f32.xlu0 %v1701
  %v1703 = vpop.xlane.xlu0 %1702
  %v1704 = vsel %vm140, %v1684, 0.0
  %1705 = vadd.xlane.f32.xlu0 %v1704
  %v1706 = vpop.xlane.xlu0 %1705
  %v1707 = vsel %vm140, %v1685, 0.0
  %1708 = vadd.xlane.f32.xlu0 %v1707
  %v1709 = vpop.xlane.xlu0 %1708
  %v1710 = vsel %vm140, %v1686, 0.0
  %1711 = vadd.xlane.f32.xlu0 %v1710
  %v1712 = vpop.xlane.xlu0 %1711
  %v1713 = vsel %vm140, %v1687, 0.0
  %1714 = vadd.xlane.f32.xlu0 %v1713
  %v1715 = vpop.xlane.xlu0 %1714
  %v1716 = vsel %vm140, %v1688, 0.0
  %1717 = vadd.xlane.f32.xlu0 %v1716
  %v1718 = vpop.xlane.xlu0 %1717
  %v1719 = vsel %vm140, %v1689, 0.0
  %1720 = vadd.xlane.f32.xlu0 %v1719
  %v1721 = vpop.xlane.xlu0 %1720
  %v1722 = vsel %vm140, %v1690, 0.0
  %1723 = vadd.xlane.f32.xlu0 %v1722
  %v1724 = vpop.xlane.xlu0 %1723
  %v1725 = vsel %vm140, %v1691, 0.0
  %1726 = vadd.xlane.f32.xlu0 %v1725
  %v1727 = vpop.xlane.xlu0 %1726
  %v1728 = vsel %vm140, %v1692, 0.0
  %1729 = vadd.xlane.f32.xlu0 %v1728
  %v1730 = vpop.xlane.xlu0 %1729
  %v1731 = vsel %vm140, %v1693, 0.0
  %1732 = vadd.xlane.f32.xlu0 %v1731
  %v1733 = vpop.xlane.xlu0 %1732
  %v1734 = vsel %vm140, %v1694, 0.0
  %1735 = vadd.xlane.f32.xlu0 %v1734
  %v1736 = vpop.xlane.xlu0 %1735
  %v1737 = vsel %vm140, %v1695, 0.0
  %1738 = vadd.xlane.f32.xlu0 %v1737
  %v1739 = vpop.xlane.xlu0 %1738
  %v1740 = vsel %vm140, %v1696, 0.0
  %1741 = vadd.xlane.f32.xlu0 %v1740
  %v1742 = vpop.xlane.xlu0 %1741
  %v1743 = vsel %vm140, %v1697, 0.0
  %1744 = vadd.xlane.f32.xlu0 %v1743
  %v1745 = vpop.xlane.xlu0 %1744
  %v1746 = vsel %vm140, %v1698, 0.0
  %1747 = vadd.xlane.f32.xlu0 %v1746
  %v1748 = vpop.xlane.xlu0 %1747
  %v1749 = vmul.f32 %v1703, %v171
  %v1750 = vmul.f32 %v1706, %v171
  %v1751 = vmul.f32 %v1709, %v171
  %v1752 = vmul.f32 %v1712, %v171
  %v1753 = vmul.f32 %v1715, %v171
  %v1754 = vmul.f32 %v1718, %v171
  %v1755 = vmul.f32 %v1721, %v171
  %v1756 = vmul.f32 %v1724, %v171
  %v1757 = vmul.f32 %v1727, %v171
  %v1758 = vmul.f32 %v1730, %v171
  %v1759 = vmul.f32 %v1733, %v171
  %v1760 = vmul.f32 %v1736, %v171
  %v1761 = vmul.f32 %v1739, %v171
  %v1762 = vmul.f32 %v1742, %v171
  %v1763 = vmul.f32 %v1745, %v171
  %v1764 = vmul.f32 %v1748, %v171
  %v1765 = vsub.f32 %v1683, %v1749
  %v1766 = vsub.f32 %v1684, %v1750
  %v1767 = vsub.f32 %v1685, %v1751
  %v1768 = vsub.f32 %v1686, %v1752
  %v1769 = vsub.f32 %v1687, %v1753
  %v1770 = vsub.f32 %v1688, %v1754
  %v1771 = vsub.f32 %v1689, %v1755
  %v1772 = vsub.f32 %v1690, %v1756
  %v1773 = vsub.f32 %v1691, %v1757
  %v1774 = vsub.f32 %v1692, %v1758
  %v1775 = vsub.f32 %v1693, %v1759
  %v1776 = vsub.f32 %v1694, %v1760
  %v1777 = vsub.f32 %v1695, %v1761
  %v1778 = vsub.f32 %v1696, %v1762
  %v1779 = vsub.f32 %v1697, %v1763
  %v1780 = vsub.f32 %v1698, %v1764
  %v1781 = vmul.f32 %v1765, %v1765
  %v1782 = vmul.f32 %v1766, %v1766
  %v1783 = vmul.f32 %v1767, %v1767
  %v1784 = vmul.f32 %v1768, %v1768
  %v1785 = vmul.f32 %v1769, %v1769
  %v1786 = vmul.f32 %v1770, %v1770
  %v1787 = vmul.f32 %v1771, %v1771
  %v1788 = vmul.f32 %v1772, %v1772
  %v1789 = vmul.f32 %v1773, %v1773
  %v1790 = vmul.f32 %v1774, %v1774
  %v1791 = vmul.f32 %v1775, %v1775
  %v1792 = vmul.f32 %v1776, %v1776
  %v1793 = vmul.f32 %v1777, %v1777
  %v1794 = vmul.f32 %v1778, %v1778
  %v1795 = vmul.f32 %v1779, %v1779
  %v1796 = vmul.f32 %v1780, %v1780
  %v1797 = vsel %vm140, %v1781, 0.0
  %1798 = vadd.xlane.f32.xlu0 %v1797
  %v1799 = vpop.xlane.xlu0 %1798
  %v1800 = vsel %vm140, %v1782, 0.0
  %1801 = vadd.xlane.f32.xlu0 %v1800
  %v1802 = vpop.xlane.xlu0 %1801
  %v1803 = vsel %vm140, %v1783, 0.0
  %1804 = vadd.xlane.f32.xlu0 %v1803
  %v1805 = vpop.xlane.xlu0 %1804
  %v1806 = vsel %vm140, %v1784, 0.0
  %1807 = vadd.xlane.f32.xlu0 %v1806
  %v1808 = vpop.xlane.xlu0 %1807
  %v1809 = vsel %vm140, %v1785, 0.0
  %1810 = vadd.xlane.f32.xlu0 %v1809
  %v1811 = vpop.xlane.xlu0 %1810
  %v1812 = vsel %vm140, %v1786, 0.0
  %1813 = vadd.xlane.f32.xlu0 %v1812
  %v1814 = vpop.xlane.xlu0 %1813
  %v1815 = vsel %vm140, %v1787, 0.0
  %1816 = vadd.xlane.f32.xlu0 %v1815
  %v1817 = vpop.xlane.xlu0 %1816
  %v1818 = vsel %vm140, %v1788, 0.0
  %1819 = vadd.xlane.f32.xlu0 %v1818
  %v1820 = vpop.xlane.xlu0 %1819
  %v1821 = vsel %vm140, %v1789, 0.0
  %1822 = vadd.xlane.f32.xlu0 %v1821
  %v1823 = vpop.xlane.xlu0 %1822
  %v1824 = vsel %vm140, %v1790, 0.0
  %1825 = vadd.xlane.f32.xlu0 %v1824
  %v1826 = vpop.xlane.xlu0 %1825
  %v1827 = vsel %vm140, %v1791, 0.0
  %1828 = vadd.xlane.f32.xlu0 %v1827
  %v1829 = vpop.xlane.xlu0 %1828
  %v1830 = vsel %vm140, %v1792, 0.0
  %1831 = vadd.xlane.f32.xlu0 %v1830
  %v1832 = vpop.xlane.xlu0 %1831
  %v1833 = vsel %vm140, %v1793, 0.0
  %1834 = vadd.xlane.f32.xlu0 %v1833
  %v1835 = vpop.xlane.xlu0 %1834
  %v1836 = vsel %vm140, %v1794, 0.0
  %1837 = vadd.xlane.f32.xlu0 %v1836
  %v1838 = vpop.xlane.xlu0 %1837
  %v1839 = vsel %vm140, %v1795, 0.0
  %1840 = vadd.xlane.f32.xlu0 %v1839
  %v1841 = vpop.xlane.xlu0 %1840
  %v1842 = vsel %vm140, %v1796, 0.0
  %1843 = vadd.xlane.f32.xlu0 %v1842
  %v1844 = vpop.xlane.xlu0 %1843
  %v1845 = vmul.f32 %v1799, %v171
  %v1846 = vmul.f32 %v1802, %v171
  %v1847 = vmul.f32 %v1805, %v171
  %v1848 = vmul.f32 %v1808, %v171
  %v1849 = vmul.f32 %v1811, %v171
  %v1850 = vmul.f32 %v1814, %v171
  %v1851 = vmul.f32 %v1817, %v171
  %v1852 = vmul.f32 %v1820, %v171
  %v1853 = vmul.f32 %v1823, %v171
  %v1854 = vmul.f32 %v1826, %v171
  %v1855 = vmul.f32 %v1829, %v171
  %v1856 = vmul.f32 %v1832, %v171
  %v1857 = vmul.f32 %v1835, %v171
  %v1858 = vmul.f32 %v1838, %v171
  %v1859 = vmul.f32 %v1841, %v171
  %v1860 = vmul.f32 %v1844, %v171
  %v1861 = vadd.f32 %v1845, 1e-05
  %v1862 = vadd.f32 %v1846, 1e-05
  %v1863 = vadd.f32 %v1847, 1e-05
  %v1864 = vadd.f32 %v1848, 1e-05
  %v1865 = vadd.f32 %v1849, 1e-05
  %v1866 = vadd.f32 %v1850, 1e-05
  %v1867 = vadd.f32 %v1851, 1e-05
  %v1868 = vadd.f32 %v1852, 1e-05
  %v1869 = vadd.f32 %v1853, 1e-05
  %v1870 = vadd.f32 %v1854, 1e-05
  %v1871 = vadd.f32 %v1855, 1e-05
  %v1872 = vadd.f32 %v1856, 1e-05
  %v1873 = vadd.f32 %v1857, 1e-05
  %v1874 = vadd.f32 %v1858, 1e-05
  %v1875 = vadd.f32 %v1859, 1e-05
  %v1876 = vadd.f32 %v1860, 1e-05
  %v1877 = vrsqrt.pop %v1861
  %v1878 = vmul.f32 %v1877, %v1861
  %v1879 = vmul.f32 %v1878, %v1877
  %v1880 = vmul.f32 0.5, %v1879
  %v1881 = vsub.f32 1.5, %v1880
  %v1882 = vmul.f32 %v1877, %v1881
  %vm1883 = vweird.f32 %v1861
  %vm1884 = vweird.f32 %v1877
  %vm1885 = vmor %vm1883, %vm1884
  %v1886 = vsel %vm1885, %v1877, %v1882
  %v1887 = vrsqrt.pop %v1862
  %v1888 = vmul.f32 %v1887, %v1862
  %v1889 = vmul.f32 %v1888, %v1887
  %v1890 = vmul.f32 0.5, %v1889
  %v1891 = vsub.f32 1.5, %v1890
  %v1892 = vmul.f32 %v1887, %v1891
  %vm1893 = vweird.f32 %v1862
  %vm1894 = vweird.f32 %v1887
  %vm1895 = vmor %vm1893, %vm1894
  %v1896 = vsel %vm1895, %v1887, %v1892
  %v1897 = vrsqrt.pop %v1863
  %v1898 = vmul.f32 %v1897, %v1863
  %v1899 = vmul.f32 %v1898, %v1897
  %v1900 = vmul.f32 0.5, %v1899
  %v1901 = vsub.f32 1.5, %v1900
  %v1902 = vmul.f32 %v1897, %v1901
  %vm1903 = vweird.f32 %v1863
  %vm1904 = vweird.f32 %v1897
  %vm1905 = vmor %vm1903, %vm1904
  %v1906 = vsel %vm1905, %v1897, %v1902
  %v1907 = vrsqrt.pop %v1864
  %v1908 = vmul.f32 %v1907, %v1864
  %v1909 = vmul.f32 %v1908, %v1907
  %v1910 = vmul.f32 0.5, %v1909
  %v1911 = vsub.f32 1.5, %v1910
  %v1912 = vmul.f32 %v1907, %v1911
  %vm1913 = vweird.f32 %v1864
  %vm1914 = vweird.f32 %v1907
  %vm1915 = vmor %vm1913, %vm1914
  %v1916 = vsel %vm1915, %v1907, %v1912
  %v1917 = vrsqrt.pop %v1865
  %v1918 = vmul.f32 %v1917, %v1865
  %v1919 = vmul.f32 %v1918, %v1917
  %v1920 = vmul.f32 0.5, %v1919
  %v1921 = vsub.f32 1.5, %v1920
  %v1922 = vmul.f32 %v1917, %v1921
  %vm1923 = vweird.f32 %v1865
  %vm1924 = vweird.f32 %v1917
  %vm1925 = vmor %vm1923, %vm1924
  %v1926 = vsel %vm1925, %v1917, %v1922
  %v1927 = vrsqrt.pop %v1866
  %v1928 = vmul.f32 %v1927, %v1866
  %v1929 = vmul.f32 %v1928, %v1927
  %v1930 = vmul.f32 0.5, %v1929
  %v1931 = vsub.f32 1.5, %v1930
  %v1932 = vmul.f32 %v1927, %v1931
  %vm1933 = vweird.f32 %v1866
  %vm1934 = vweird.f32 %v1927
  %vm1935 = vmor %vm1933, %vm1934
  %v1936 = vsel %vm1935, %v1927, %v1932
  %v1937 = vrsqrt.pop %v1867
  %v1938 = vmul.f32 %v1937, %v1867
  %v1939 = vmul.f32 %v1938, %v1937
  %v1940 = vmul.f32 0.5, %v1939
  %v1941 = vsub.f32 1.5, %v1940
  %v1942 = vmul.f32 %v1937, %v1941
  %vm1943 = vweird.f32 %v1867
  %vm1944 = vweird.f32 %v1937
  %vm1945 = vmor %vm1943, %vm1944
  %v1946 = vsel %vm1945, %v1937, %v1942
  %v1947 = vrsqrt.pop %v1868
  %v1948 = vmul.f32 %v1947, %v1868
  %v1949 = vmul.f32 %v1948, %v1947
  %v1950 = vmul.f32 0.5, %v1949
  %v1951 = vsub.f32 1.5, %v1950
  %v1952 = vmul.f32 %v1947, %v1951
  %vm1953 = vweird.f32 %v1868
  %vm1954 = vweird.f32 %v1947
  %vm1955 = vmor %vm1953, %vm1954
  %v1956 = vsel %vm1955, %v1947, %v1952
  %v1957 = vrsqrt.pop %v1869
  %v1958 = vmul.f32 %v1957, %v1869
  %v1959 = vmul.f32 %v1958, %v1957
  %v1960 = vmul.f32 0.5, %v1959
  %v1961 = vsub.f32 1.5, %v1960
  %v1962 = vmul.f32 %v1957, %v1961
  %vm1963 = vweird.f32 %v1869
  %vm1964 = vweird.f32 %v1957
  %vm1965 = vmor %vm1963, %vm1964
  %v1966 = vsel %vm1965, %v1957, %v1962
  %v1967 = vrsqrt.pop %v1870
  %v1968 = vmul.f32 %v1967, %v1870
  %v1969 = vmul.f32 %v1968, %v1967
  %v1970 = vmul.f32 0.5, %v1969
  %v1971 = vsub.f32 1.5, %v1970
  %v1972 = vmul.f32 %v1967, %v1971
  %vm1973 = vweird.f32 %v1870
  %vm1974 = vweird.f32 %v1967
  %vm1975 = vmor %vm1973, %vm1974
  %v1976 = vsel %vm1975, %v1967, %v1972
  %v1977 = vrsqrt.pop %v1871
  %v1978 = vmul.f32 %v1977, %v1871
  %v1979 = vmul.f32 %v1978, %v1977
  %v1980 = vmul.f32 0.5, %v1979
  %v1981 = vsub.f32 1.5, %v1980
  %v1982 = vmul.f32 %v1977, %v1981
  %vm1983 = vweird.f32 %v1871
  %vm1984 = vweird.f32 %v1977
  %vm1985 = vmor %vm1983, %vm1984
  %v1986 = vsel %vm1985, %v1977, %v1982
  %v1987 = vrsqrt.pop %v1872
  %v1988 = vmul.f32 %v1987, %v1872
  %v1989 = vmul.f32 %v1988, %v1987
  %v1990 = vmul.f32 0.5, %v1989
  %v1991 = vsub.f32 1.5, %v1990
  %v1992 = vmul.f32 %v1987, %v1991
  %vm1993 = vweird.f32 %v1872
  %vm1994 = vweird.f32 %v1987
  %vm1995 = vmor %vm1993, %vm1994
  %v1996 = vsel %vm1995, %v1987, %v1992
  %v1997 = vrsqrt.pop %v1873
  %v1998 = vmul.f32 %v1997, %v1873
  %v1999 = vmul.f32 %v1998, %v1997
  %v2000 = vmul.f32 0.5, %v1999
  %v2001 = vsub.f32 1.5, %v2000
  %v2002 = vmul.f32 %v1997, %v2001
  %vm2003 = vweird.f32 %v1873
  %vm2004 = vweird.f32 %v1997
  %vm2005 = vmor %vm2003, %vm2004
  %v2006 = vsel %vm2005, %v1997, %v2002
  %v2007 = vrsqrt.pop %v1874
  %v2008 = vmul.f32 %v2007, %v1874
  %v2009 = vmul.f32 %v2008, %v2007
  %v2010 = vmul.f32 0.5, %v2009
  %v2011 = vsub.f32 1.5, %v2010
  %v2012 = vmul.f32 %v2007, %v2011
  %vm2013 = vweird.f32 %v1874
  %vm2014 = vweird.f32 %v2007
  %vm2015 = vmor %vm2013, %vm2014
  %v2016 = vsel %vm2015, %v2007, %v2012
  %v2017 = vrsqrt.pop %v1875
  %v2018 = vmul.f32 %v2017, %v1875
  %v2019 = vmul.f32 %v2018, %v2017
  %v2020 = vmul.f32 0.5, %v2019
  %v2021 = vsub.f32 1.5, %v2020
  %v2022 = vmul.f32 %v2017, %v2021
  %vm2023 = vweird.f32 %v1875
  %vm2024 = vweird.f32 %v2017
  %vm2025 = vmor %vm2023, %vm2024
  %v2026 = vsel %vm2025, %v2017, %v2022
  %v2027 = vrsqrt.pop %v1876
  %v2028 = vmul.f32 %v2027, %v1876
  %v2029 = vmul.f32 %v2028, %v2027
  %v2030 = vmul.f32 0.5, %v2029
  %v2031 = vsub.f32 1.5, %v2030
  %v2032 = vmul.f32 %v2027, %v2031
  %vm2033 = vweird.f32 %v1876
  %vm2034 = vweird.f32 %v2027
  %vm2035 = vmor %vm2033, %vm2034
  %v2036 = vsel %vm2035, %v2027, %v2032
  %v2037 = vmul.f32 %v1765, %v1886
  %v2038 = vmul.f32 %v1766, %v1896
  %v2039 = vmul.f32 %v1767, %v1906
  %v2040 = vmul.f32 %v1768, %v1916
  %v2041 = vmul.f32 %v1769, %v1926
  %v2042 = vmul.f32 %v1770, %v1936
  %v2043 = vmul.f32 %v1771, %v1946
  %v2044 = vmul.f32 %v1772, %v1956
  %v2045 = vmul.f32 %v1773, %v1966
  %v2046 = vmul.f32 %v1774, %v1976
  %v2047 = vmul.f32 %v1775, %v1986
  %v2048 = vmul.f32 %v1776, %v1996
  %v2049 = vmul.f32 %v1777, %v2006
  %v2050 = vmul.f32 %v1778, %v2016
  %v2051 = vmul.f32 %v1779, %v2026
  %v2052 = vmul.f32 %v1780, %v2036
  %v2054 = vperm.slane %v1699, 0
  %v2056 = vmul.f32 %v2037, %v2054
  %v2057 = vmul.f32 %v2038, %v2054
  %v2058 = vmul.f32 %v2039, %v2054
  %v2059 = vmul.f32 %v2040, %v2054
  %v2060 = vmul.f32 %v2041, %v2054
  %v2061 = vmul.f32 %v2042, %v2054
  %v2062 = vmul.f32 %v2043, %v2054
  %v2063 = vmul.f32 %v2044, %v2054
  %v2064 = vmul.f32 %v2045, %v2054
  %v2065 = vmul.f32 %v2046, %v2054
  %v2066 = vmul.f32 %v2047, %v2054
  %v2067 = vmul.f32 %v2048, %v2054
  %v2068 = vmul.f32 %v2049, %v2054
  %v2069 = vmul.f32 %v2050, %v2054
  %v2070 = vmul.f32 %v2051, %v2054
  %v2071 = vmul.f32 %v2052, %v2054
  %v2073 = vperm.slane %v1700, 0
  %v2075 = vadd.f32 %v2056, %v2073
  %v2076 = vadd.f32 %v2057, %v2073
  %v2077 = vadd.f32 %v2058, %v2073
  %v2078 = vadd.f32 %v2059, %v2073
  %v2079 = vadd.f32 %v2060, %v2073
  %v2080 = vadd.f32 %v2061, %v2073
  %v2081 = vadd.f32 %v2062, %v2073
  %v2082 = vadd.f32 %v2063, %v2073
  %v2083 = vadd.f32 %v2064, %v2073
  %v2084 = vadd.f32 %v2065, %v2073
  %v2085 = vadd.f32 %v2066, %v2073
  %v2086 = vadd.f32 %v2067, %v2073
  %v2087 = vadd.f32 %v2068, %v2073
  %v2088 = vadd.f32 %v2069, %v2073
  %v2089 = vadd.f32 %v2070, %v2073
  %v2090 = vadd.f32 %v2071, %v2073
  %v2091 = vpack.c.bf16 %v2076, %v2075
  %v2092 = vpack.c.bf16 %v2078, %v2077
  %v2093 = vpack.c.bf16 %v2080, %v2079
  %v2094 = vpack.c.bf16 %v2082, %v2081
  %v2095 = vpack.c.bf16 %v2084, %v2083
  %v2096 = vpack.c.bf16 %v2086, %v2085
  %v2097 = vpack.c.bf16 %v2088, %v2087
  %v2098 = vpack.c.bf16 %v2090, %v2089
  %v2099 = vld [vmem:[%s16] sm:$0xf]
  %v2100 = vld [vmem:[%s16 + $0x4] sm:$0xf]
  %v2101 = vld [vmem:[%s16 + $0x8] sm:$0xf]
  %v2102 = vld [vmem:[%s16 + $0xc] sm:$0xf]
  %v2103 = vld [vmem:[%s17] sm:$0x1]
  %v2105 = vperm.slane %v2103, 0
  %v2111 = vunpack.c.l.b16 %v2099
  %v2112 = vunpack.c.l.b16 %v2100
  %v2113 = vunpack.c.l.b16 %v2101
  %v2114 = vunpack.c.l.b16 %v2102
  %v2115 = vpack.c.b16 %v2112, %v2111
  %v2116 = vpack.c.b16 %v2114, %v2113
  %v2120 = vsel %vm140, %v2091, 0
  %v2123 = vsel %vm140, %v2092, 0
  %v2126 = vsel %vm140, %v2093, 0
  %v2129 = vsel %vm140, %v2094, 0
  %v2132 = vsel %vm140, %v2095, 0
  %v2135 = vsel %vm140, %v2096, 0
  %v2138 = vsel %vm140, %v2097, 0
  %v2141 = vsel %vm140, %v2098, 0
  %2143 = vmatpush.bf16.msra.mxu0 0
  %2144 = vmatpush.bf16.msra.mxu0 0
  %2145 = vmatpush.bf16.msra.mxu0 0
  %2146 = vmatpush.bf16.msra.mxu0 0
  %2147 = vmatpush.bf16.msra.mxu0 0
  %2148 = vmatpush.bf16.msra.mxu0 0
  %2149 = vmatpush.bf16.msra.mxu0 %v2116
  %2150 = vmatpush.bf16.msra.mxu0 %v2115
  %2151 = vmatmul.bf16.gmra.mxu0 %v2120
  %v2152 = vpop.f32.mrf.mxu0
  %v2153 = vadd.f32 %v2105, %v2152
  %v2154 = vpop.f32.mrf.mxu0
  %v2155 = vadd.f32 %v2105, %v2154
  %2156 = vmatmul.bf16.gmra.mxu0 %v2123
  %v2157 = vpop.f32.mrf.mxu0
  %v2158 = vadd.f32 %v2105, %v2157
  %v2159 = vpop.f32.mrf.mxu0
  %v2160 = vadd.f32 %v2105, %v2159
  %2161 = vmatmul.bf16.gmra.mxu0 %v2126
  %v2162 = vpop.f32.mrf.mxu0
  %v2163 = vadd.f32 %v2105, %v2162
  %v2164 = vpop.f32.mrf.mxu0
  %v2165 = vadd.f32 %v2105, %v2164
  %2166 = vmatmul.bf16.gmra.mxu0 %v2129
  %v2167 = vpop.f32.mrf.mxu0
  %v2168 = vadd.f32 %v2105, %v2167
  %v2169 = vpop.f32.mrf.mxu0
  %v2170 = vadd.f32 %v2105, %v2169
  %2171 = vmatmul.bf16.gmra.mxu0 %v2132
  %v2172 = vpop.f32.mrf.mxu0
  %v2173 = vadd.f32 %v2105, %v2172
  %v2174 = vpop.f32.mrf.mxu0
  %v2175 = vadd.f32 %v2105, %v2174
  %2176 = vmatmul.bf16.gmra.mxu0 %v2135
  %v2177 = vpop.f32.mrf.mxu0
  %v2178 = vadd.f32 %v2105, %v2177
  %v2179 = vpop.f32.mrf.mxu0
  %v2180 = vadd.f32 %v2105, %v2179
  %2181 = vmatmul.bf16.gmra.mxu0 %v2138
  %v2182 = vpop.f32.mrf.mxu0
  %v2183 = vadd.f32 %v2105, %v2182
  %v2184 = vpop.f32.mrf.mxu0
  %v2185 = vadd.f32 %v2105, %v2184
  %2186 = vmatmul.bf16.gmra.mxu0 %v2141
  %v2187 = vpop.f32.mrf.mxu0
  %v2188 = vadd.f32 %v2105, %v2187
  %v2189 = vpop.f32.mrf.mxu0
  %v2190 = vadd.f32 %v2105, %v2189
  %2191 = vdwg.mxu0
  %v2192 = vmul.f32 %v2153, 0.5
  %v2193 = vmul.f32 %v2155, 0.5
  %v2194 = vmul.f32 %v2158, 0.5
  %v2195 = vmul.f32 %v2160, 0.5
  %v2196 = vmul.f32 %v2163, 0.5
  %v2197 = vmul.f32 %v2165, 0.5
  %v2198 = vmul.f32 %v2168, 0.5
  %v2199 = vmul.f32 %v2170, 0.5
  %v2200 = vmul.f32 %v2173, 0.5
  %v2201 = vmul.f32 %v2175, 0.5
  %v2202 = vmul.f32 %v2178, 0.5
  %v2203 = vmul.f32 %v2180, 0.5
  %v2204 = vmul.f32 %v2183, 0.5
  %v2205 = vmul.f32 %v2185, 0.5
  %v2206 = vmul.f32 %v2188, 0.5
  %v2207 = vmul.f32 %v2190, 0.5
  %v2208 = vmul.f32 %v2153, 0.044715
  %v2209 = vmul.f32 %v2155, 0.044715
  %v2210 = vmul.f32 %v2158, 0.044715
  %v2211 = vmul.f32 %v2160, 0.044715
  %v2212 = vmul.f32 %v2163, 0.044715
  %v2213 = vmul.f32 %v2165, 0.044715
  %v2214 = vmul.f32 %v2168, 0.044715
  %v2215 = vmul.f32 %v2170, 0.044715
  %v2216 = vmul.f32 %v2173, 0.044715
  %v2217 = vmul.f32 %v2175, 0.044715
  %v2218 = vmul.f32 %v2178, 0.044715
  %v2219 = vmul.f32 %v2180, 0.044715
  %v2220 = vmul.f32 %v2183, 0.044715
  %v2221 = vmul.f32 %v2185, 0.044715
  %v2222 = vmul.f32 %v2188, 0.044715
  %v2223 = vmul.f32 %v2190, 0.044715
  %v2224 = vmul.f32 %v2208, %v2153
  %v2225 = vmul.f32 %v2209, %v2155
  %v2226 = vmul.f32 %v2210, %v2158
  %v2227 = vmul.f32 %v2211, %v2160
  %v2228 = vmul.f32 %v2212, %v2163
  %v2229 = vmul.f32 %v2213, %v2165
  %v2230 = vmul.f32 %v2214, %v2168
  %v2231 = vmul.f32 %v2215, %v2170
  %v2232 = vmul.f32 %v2216, %v2173
  %v2233 = vmul.f32 %v2217, %v2175
  %v2234 = vmul.f32 %v2218, %v2178
  %v2235 = vmul.f32 %v2219, %v2180
  %v2236 = vmul.f32 %v2220, %v2183
  %v2237 = vmul.f32 %v2221, %v2185
  %v2238 = vmul.f32 %v2222, %v2188
  %v2239 = vmul.f32 %v2223, %v2190
  %v2240 = vmul.f32 %v2224, %v2153
  %v2241 = vmul.f32 %v2225, %v2155
  %v2242 = vmul.f32 %v2226, %v2158
  %v2243 = vmul.f32 %v2227, %v2160
  %v2244 = vmul.f32 %v2228, %v2163
  %v2245 = vmul.f32 %v2229, %v2165
  %v2246 = vmul.f32 %v2230, %v2168
  %v2247 = vmul.f32 %v2231, %v2170
  %v2248 = vmul.f32 %v2232, %v2173
  %v2249 = vmul.f32 %v2233, %v2175
  %v2250 = vmul.f32 %v2234, %v2178
  %v2251 = vmul.f32 %v2235, %v2180
  %v2252 = vmul.f32 %v2236, %v2183
  %v2253 = vmul.f32 %v2237, %v2185
  %v2254 = vmul.f32 %v2238, %v2188
  %v2255 = vmul.f32 %v2239, %v2190
  %v2256 = vadd.f32 %v2153, %v2240
  %v2257 = vadd.f32 %v2155, %v2241
  %v2258 = vadd.f32 %v2158, %v2242
  %v2259 = vadd.f32 %v2160, %v2243
  %v2260 = vadd.f32 %v2163, %v2244
  %v2261 = vadd.f32 %v2165, %v2245
  %v2262 = vadd.f32 %v2168, %v2246
  %v2263 = vadd.f32 %v2170, %v2247
  %v2264 = vadd.f32 %v2173, %v2248
  %v2265 = vadd.f32 %v2175, %v2249
  %v2266 = vadd.f32 %v2178, %v2250
  %v2267 = vadd.f32 %v2180, %v2251
  %v2268 = vadd.f32 %v2183, %v2252
  %v2269 = vadd.f32 %v2185, %v2253
  %v2270 = vadd.f32 %v2188, %v2254
  %v2271 = vadd.f32 %v2190, %v2255
  %v2272 = vmul.f32 %v2256, 0.7978846
  %v2273 = vmul.f32 %v2257, 0.7978846
  %v2274 = vmul.f32 %v2258, 0.7978846
  %v2275 = vmul.f32 %v2259, 0.7978846
  %v2276 = vmul.f32 %v2260, 0.7978846
  %v2277 = vmul.f32 %v2261, 0.7978846
  %v2278 = vmul.f32 %v2262, 0.7978846
  %v2279 = vmul.f32 %v2263, 0.7978846
  %v2280 = vmul.f32 %v2264, 0.7978846
  %v2281 = vmul.f32 %v2265, 0.7978846
  %v2282 = vmul.f32 %v2266, 0.7978846
  %v2283 = vmul.f32 %v2267, 0.7978846
  %v2284 = vmul.f32 %v2268, 0.7978846
  %v2285 = vmul.f32 %v2269, 0.7978846
  %v2286 = vmul.f32 %v2270, 0.7978846
  %v2287 = vmul.f32 %v2271, 0.7978846
  %v2288 = vtanh.pop %v2272
  %v2289 = vtanh.pop %v2273
  %v2290 = vtanh.pop %v2274
  %v2291 = vtanh.pop %v2275
  %v2292 = vtanh.pop %v2276
  %v2293 = vtanh.pop %v2277
  %v2294 = vtanh.pop %v2278
  %v2295 = vtanh.pop %v2279
  %v2296 = vtanh.pop %v2280
  %v2297 = vtanh.pop %v2281
  %v2298 = vtanh.pop %v2282
  %v2299 = vtanh.pop %v2283
  %v2300 = vtanh.pop %v2284
  %v2301 = vtanh.pop %v2285
  %v2302 = vtanh.pop %v2286
  %v2303 = vtanh.pop %v2287
  %v2304 = vadd.f32 %v2288, 1.0
  %v2305 = vadd.f32 %v2289, 1.0
  %v2306 = vadd.f32 %v2290, 1.0
  %v2307 = vadd.f32 %v2291, 1.0
  %v2308 = vadd.f32 %v2292, 1.0
  %v2309 = vadd.f32 %v2293, 1.0
  %v2310 = vadd.f32 %v2294, 1.0
  %v2311 = vadd.f32 %v2295, 1.0
  %v2312 = vadd.f32 %v2296, 1.0
  %v2313 = vadd.f32 %v2297, 1.0
  %v2314 = vadd.f32 %v2298, 1.0
  %v2315 = vadd.f32 %v2299, 1.0
  %v2316 = vadd.f32 %v2300, 1.0
  %v2317 = vadd.f32 %v2301, 1.0
  %v2318 = vadd.f32 %v2302, 1.0
  %v2319 = vadd.f32 %v2303, 1.0
  %v2320 = vmul.f32 %v2192, %v2304
  %v2321 = vmul.f32 %v2193, %v2305
  %v2322 = vmul.f32 %v2194, %v2306
  %v2323 = vmul.f32 %v2195, %v2307
  %v2324 = vmul.f32 %v2196, %v2308
  %v2325 = vmul.f32 %v2197, %v2309
  %v2326 = vmul.f32 %v2198, %v2310
  %v2327 = vmul.f32 %v2199, %v2311
  %v2328 = vmul.f32 %v2200, %v2312
  %v2329 = vmul.f32 %v2201, %v2313
  %v2330 = vmul.f32 %v2202, %v2314
  %v2331 = vmul.f32 %v2203, %v2315
  %v2332 = vmul.f32 %v2204, %v2316
  %v2333 = vmul.f32 %v2205, %v2317
  %v2334 = vmul.f32 %v2206, %v2318
  %v2335 = vmul.f32 %v2207, %v2319
  %v2336 = vpack.c.bf16 %v2321, %v2320
  %v2337 = vpack.c.bf16 %v2323, %v2322
  %v2338 = vpack.c.bf16 %v2325, %v2324
  %v2339 = vpack.c.bf16 %v2327, %v2326
  %v2340 = vpack.c.bf16 %v2329, %v2328
  %v2341 = vpack.c.bf16 %v2331, %v2330
  %v2342 = vpack.c.bf16 %v2333, %v2332
  %v2343 = vpack.c.bf16 %v2335, %v2334
  %v2344 = vld [vmem:[%s18] sm:$0xf]
  %v2345 = vld [vmem:[%s18 + $0x4] sm:$0xf]
  %v2346 = vld [vmem:[%s18 + $0x8] sm:$0xf]
  %v2347 = vld [vmem:[%s18 + $0xc] sm:$0xf]
  %v2348 = vld [vmem:[%s18 + $0x10] sm:$0xf]
  %v2349 = vld [vmem:[%s18 + $0x14] sm:$0xf]
  %v2350 = vld [vmem:[%s18 + $0x18] sm:$0xf]
  %v2351 = vld [vmem:[%s18 + $0x1c] sm:$0xf]
  %v2352 = vld [vmem:[%s18 + $0x20] sm:$0xf]
  %v2353 = vld [vmem:[%s18 + $0x24] sm:$0xf]
  %v2354 = vld [vmem:[%s18 + $0x28] sm:$0xf]
  %v2355 = vld [vmem:[%s18 + $0x2c] sm:$0xf]
  %v2356 = vld [vmem:[%s18 + $0x30] sm:$0xf]
  %v2357 = vld [vmem:[%s18 + $0x34] sm:$0xf]
  %v2358 = vld [vmem:[%s18 + $0x38] sm:$0xf]
  %v2359 = vld [vmem:[%s18 + $0x3c] sm:$0xf]
  %v2360 = vld [vmem:[%s19] sm:$0x1]
  %v2362 = vperm.slane %v2360, 0
  %v2380 = vunpack.c.l.b16 %v2344
  %v2381 = vunpack.c.l.b16 %v2345
  %v2382 = vunpack.c.l.b16 %v2346
  %v2383 = vunpack.c.l.b16 %v2347
  %v2384 = vunpack.c.l.b16 %v2348
  %v2385 = vunpack.c.l.b16 %v2349
  %v2386 = vunpack.c.l.b16 %v2350
  %v2387 = vunpack.c.l.b16 %v2351
  %v2388 = vunpack.c.l.b16 %v2352
  %v2389 = vunpack.c.l.b16 %v2353
  %v2390 = vunpack.c.l.b16 %v2354
  %v2391 = vunpack.c.l.b16 %v2355
  %v2392 = vunpack.c.l.b16 %v2356
  %v2393 = vunpack.c.l.b16 %v2357
  %v2394 = vunpack.c.l.b16 %v2358
  %v2395 = vunpack.c.l.b16 %v2359
  %v2396 = vpack.c.b16 %v2381, %v2380
  %v2397 = vpack.c.b16 %v2383, %v2382
  %v2398 = vpack.c.b16 %v2385, %v2384
  %v2399 = vpack.c.b16 %v2387, %v2386
  %v2400 = vpack.c.b16 %v2389, %v2388
  %v2401 = vpack.c.b16 %v2391, %v2390
  %v2402 = vpack.c.b16 %v2393, %v2392
  %v2403 = vpack.c.b16 %v2395, %v2394
  %2412 = vmatpush.bf16.msra.mxu0 %v2403
  %2413 = vmatpush.bf16.msra.mxu0 %v2402
  %2414 = vmatpush.bf16.msra.mxu0 %v2401
  %2415 = vmatpush.bf16.msra.mxu0 %v2400
  %2416 = vmatpush.bf16.msra.mxu0 %v2399
  %2417 = vmatpush.bf16.msra.mxu0 %v2398
  %2418 = vmatpush.bf16.msra.mxu0 %v2397
  %2419 = vmatpush.bf16.msra.mxu0 %v2396
  %2420 = vmatmul.bf16.gmra.mxu0 %v2336
  %v2421 = vpop.f32.mrf.mxu0
  %v2422 = vadd.f32 %v2362, %v2421
  %v2423 = vpop.f32.mrf.mxu0
  %v2424 = vadd.f32 %v2362, %v2423
  %2425 = vmatmul.bf16.gmra.mxu0 %v2337
  %v2426 = vpop.f32.mrf.mxu0
  %v2427 = vadd.f32 %v2362, %v2426
  %v2428 = vpop.f32.mrf.mxu0
  %v2429 = vadd.f32 %v2362, %v2428
  %2430 = vmatmul.bf16.gmra.mxu0 %v2338
  %v2431 = vpop.f32.mrf.mxu0
  %v2432 = vadd.f32 %v2362, %v2431
  %v2433 = vpop.f32.mrf.mxu0
  %v2434 = vadd.f32 %v2362, %v2433
  %2435 = vmatmul.bf16.gmra.mxu0 %v2339
  %v2436 = vpop.f32.mrf.mxu0
  %v2437 = vadd.f32 %v2362, %v2436
  %v2438 = vpop.f32.mrf.mxu0
  %v2439 = vadd.f32 %v2362, %v2438
  %2440 = vmatmul.bf16.gmra.mxu0 %v2340
  %v2441 = vpop.f32.mrf.mxu0
  %v2442 = vadd.f32 %v2362, %v2441
  %v2443 = vpop.f32.mrf.mxu0
  %v2444 = vadd.f32 %v2362, %v2443
  %2445 = vmatmul.bf16.gmra.mxu0 %v2341
  %v2446 = vpop.f32.mrf.mxu0
  %v2447 = vadd.f32 %v2362, %v2446
  %v2448 = vpop.f32.mrf.mxu0
  %v2449 = vadd.f32 %v2362, %v2448
  %2450 = vmatmul.bf16.gmra.mxu0 %v2342
  %v2451 = vpop.f32.mrf.mxu0
  %v2452 = vadd.f32 %v2362, %v2451
  %v2453 = vpop.f32.mrf.mxu0
  %v2454 = vadd.f32 %v2362, %v2453
  %2455 = vmatmul.bf16.gmra.mxu0 %v2343
  %v2456 = vpop.f32.mrf.mxu0
  %v2457 = vadd.f32 %v2362, %v2456
  %v2458 = vpop.f32.mrf.mxu0
  %v2459 = vadd.f32 %v2362, %v2458
  %2460 = vdwg.mxu0
  %v2461 = vadd.f32 %v1683, %v2422
  %v2462 = vadd.f32 %v1684, %v2424
  %v2463 = vadd.f32 %v1685, %v2427
  %v2464 = vadd.f32 %v1686, %v2429
  %v2465 = vadd.f32 %v1687, %v2432
  %v2466 = vadd.f32 %v1688, %v2434
  %v2467 = vadd.f32 %v1689, %v2437
  %v2468 = vadd.f32 %v1690, %v2439
  %v2469 = vadd.f32 %v1691, %v2442
  %v2470 = vadd.f32 %v1692, %v2444
  %v2471 = vadd.f32 %v1693, %v2447
  %v2472 = vadd.f32 %v1694, %v2449
  %v2473 = vadd.f32 %v1695, %v2452
  %v2474 = vadd.f32 %v1696, %v2454
  %v2475 = vadd.f32 %v1697, %v2457
  %v2476 = vadd.f32 %v1698, %v2459
  %2477 = vst.msk [vmem:[%s20] sm:$0xff] %vm140, %v2461
  %2478 = vst.msk [vmem:[%s20 + $0x8] sm:$0xff] %vm140, %v2462
  %2479 = vst.msk [vmem:[%s20 + $0x10] sm:$0xff] %vm140, %v2463
  %2480 = vst.msk [vmem:[%s20 + $0x18] sm:$0xff] %vm140, %v2464
  %2481 = vst.msk [vmem:[%s20 + $0x20] sm:$0xff] %vm140, %v2465
  %2482 = vst.msk [vmem:[%s20 + $0x28] sm:$0xff] %vm140, %v2466
  %2483 = vst.msk [vmem:[%s20 + $0x30] sm:$0xff] %vm140, %v2467
  %2484 = vst.msk [vmem:[%s20 + $0x38] sm:$0xff] %vm140, %v2468
  %2485 = vst.msk [vmem:[%s20 + $0x40] sm:$0xff] %vm140, %v2469
  %2486 = vst.msk [vmem:[%s20 + $0x48] sm:$0xff] %vm140, %v2470
  %2487 = vst.msk [vmem:[%s20 + $0x50] sm:$0xff] %vm140, %v2471
  %2488 = vst.msk [vmem:[%s20 + $0x58] sm:$0xff] %vm140, %v2472
  %2489 = vst.msk [vmem:[%s20 + $0x60] sm:$0xff] %vm140, %v2473
  %2490 = vst.msk [vmem:[%s20 + $0x68] sm:$0xff] %vm140, %v2474
  %2491 = vst.msk [vmem:[%s20 + $0x70] sm:$0xff] %vm140, %v2475
  %2492 = vst.msk [vmem:[%s20 + $0x78] sm:$0xff] %vm140, %v2476
  // Predicated region
  $region82: #{tpu_custom_call.1} parent=0 // pred_check
    _
  $region83: #{tpu_custom_call.1} parent=0 // pred_check_branch
    %2494 = sbr.rel (0) target = $region85
  $region84: #{tpu_custom_call.1} parent=0 // pred_region
    _
  $region85: #{tpu_custom_call.1} parent=0 // pred_fallthru
    _
  // Predicated region
  $region86: #{tpu_custom_call.1} parent=0 // pred_check
    _
  $region87: #{tpu_custom_call.1} parent=0 // pred_check_branch
    %2496 = sbr.rel (0) target = $region89
  $region88: #{tpu_custom_call.1} parent=0 // pred_region
    _
  $region89: #{tpu_custom_call.1} parent=0 // pred_fallthru
    _

</llo_original>
